<compile_context>
chip_gen: v5e
topology: v5e:2x2
jax: 0.10.0
libtpu: 0.0.40
codegen_flags: <defaults>
</compile_context>

<pallas_src>
import functools

import jax
import jax.numpy as jnp
from jax import lax
from jax.experimental import pallas as pl
from jax.experimental.pallas import tpu as pltpu


def _round_up(v: int, m: int) -> int:
    return (v + m - 1) // m * m


def _gru_classifier_kernel(x_ref, w_ref, v_ref, out_ref, *, H, Hp, n_state, f_rows):
    """x_ref: (B, T, F); w_ref: (f_rows + 2H, 3Hp) packed weights; v_ref: (8, 3Hp) packed vectors."""
    B, T, F = x_ref.shape
    G = 3 * Hp

    # ---- One-time static slices of the packed operands (whole-tile / aligned). ----
    w_ih_t = w_ref[0:F, :]                                    # (F, 3Hp)   gate-lane-padded
    w_hh_t = w_ref[f_rows:f_rows + H, :]                      # (H, 3Hp)   only H contraction rows
    w_lin_t = w_ref[f_rows + H:f_rows + 2 * H, 0:n_state]     # (H, n_state)

    b_ih = v_ref[0:1, :]                                      # (1, 3Hp)
    b_hh = v_ref[1:2, :]                                      # (1, 3Hp)
    bn_scale = v_ref[2:3, 0:Hp]                               # (1, Hp)  = gamma / sqrt(var + eps)
    bn_shift = v_ref[3:4, 0:Hp]                               # (1, Hp)  = beta - mean * scale
    b_lin = v_ref[4:5, 0:n_state]                             # (1, n_state)

    # ---- Hoisted input projection: one MXU matmul covering every time step, then one
    #      transpose to t-major so per-step slices are leading-axis whole-tile slices. ----
    x2d = x_ref[...].reshape(B * T, F)                        # b-major rows (free reshape)
    gx = jnp.dot(x2d, w_ih_t, preferred_element_type=jnp.float32) + b_ih   # (B*T, 3Hp)
    gx_tm = jnp.transpose(gx.reshape(B, T, G), (1, 0, 2))     # (T, B, 3Hp), single relayout

    # ---- Sequential GRU recurrence, fully unrolled (T small and static).  Only the
    #      h-dependent (B,H)@(H,3Hp) dot sits on the serial critical path. ----
    h = jnp.zeros((B, Hp), jnp.float32)                       # pad lanes stay exactly 0
    for t in range(T):
        gx_t = gx_tm[t]                                       # (B, 3Hp) whole-tile slice
        gh = jnp.dot(h[:, :H], w_hh_t, preferred_element_type=jnp.float32) + b_hh
        r = jax.nn.sigmoid(gx_t[:, 0:Hp] + gh[:, 0:Hp])
        z = jax.nn.sigmoid(gx_t[:, Hp:2 * Hp] + gh[:, Hp:2 * Hp])
        n = jnp.tanh(gx_t[:, 2 * Hp:3 * Hp] + r * gh[:, 2 * Hp:3 * Hp])
        h = (1.0 - z) * n + z * h

    # ---- Fused head: folded BatchNorm1d (eval) -> ReLU -> Dropout(eval = id) -> Linear. ----
    xh = jnp.maximum(h * bn_scale + bn_shift, 0.0)            # pad lanes stay 0 (scale/shift pads = 0)
    out = jnp.dot(xh[:, :H], w_lin_t, preferred_element_type=jnp.float32) + b_lin
    out_ref[...] = out.astype(out_ref.dtype)


def prepare_params(params, eps: float = 1e-5):
    """One-time layout plumbing: pack all weights/stats into two VMEM-friendly slabs.

    Runs once at parameter-prep time; the per-call forward launches only the Pallas kernel.
    Padding is exact w.r.t. the unpadded math (zero gate-lane pads, zero scale/shift pads).
    """
    H = params["w_hh"].shape[1]
    F = params["w_ih"].shape[1]
    n_state = params["w_lin"].shape[0]
    Hp = _round_up(H, 128)            # per-gate lane padding -> vreg-aligned gate slices
    G = 3 * Hp
    f_rows = _round_up(F, 8)          # sublane-aligned start row for W_hh^T inside wpack

    def pad_gate_cols(w_t):
        """(rows, 3H) with gates stacked [r,z,n] -> (rows, 3Hp), each gate zero-padded."""
        rows = w_t.shape[0]
        out = jnp.zeros((rows, G), jnp.float32)
        for g in range(3):
            out = out.at[:, g * Hp:g * Hp + H].set(w_t[:, g * H:(g + 1) * H])
        return out

    wpack = jnp.zeros((f_rows + 2 * H, G), jnp.float32)
    wpack = wpack.at[0:F, :].set(pad_gate_cols(params["w_ih"].T.astype(jnp.float32)))
    wpack = wpack.at[f_rows:f_rows + H, :].set(pad_gate_cols(params["w_hh"].T.astype(jnp.float32)))
    wpack = wpack.at[f_rows + H:f_rows + 2 * H, 0:n_state].set(params["w_lin"].T.astype(jnp.float32))

    # Fold eval-mode BatchNorm1d into a single scale/shift pair (torch eps = 1e-5).
    scale = params["bn_gamma"].astype(jnp.float32) / jnp.sqrt(params["bn_var"].astype(jnp.float32) + eps)
    shift = params["bn_beta"].astype(jnp.float32) - params["bn_mean"].astype(jnp.float32) * scale

    vpack = jnp.zeros((8, G), jnp.float32)
    vpack = vpack.at[0:1, :].set(pad_gate_cols(params["b_ih"].reshape(1, 3 * H).astype(jnp.float32)))
    vpack = vpack.at[1:2, :].set(pad_gate_cols(params["b_hh"].reshape(1, 3 * H).astype(jnp.float32)))
    vpack = vpack.at[2, 0:H].set(scale)
    vpack = vpack.at[3, 0:H].set(shift)
    vpack = vpack.at[4, 0:n_state].set(params["b_lin"].astype(jnp.float32))

    return {"wpack": wpack, "vpack": vpack,
            "H": H, "Hp": Hp, "n_state": n_state, "f_rows": f_rows}


@functools.partial(jax.jit, static_argnames=("H", "Hp", "n_state", "f_rows"))
def _forward(x, wpack, vpack, *, H, Hp, n_state, f_rows):
    B = x.shape[0]
    kernel = functools.partial(_gru_classifier_kernel, H=H, Hp=Hp,
                               n_state=n_state, f_rows=f_rows)
    vmem = functools.partial(pl.BlockSpec, memory_space=pltpu.MemorySpace.VMEM)
    # Grid-less call: one invocation, whole arrays resident in VMEM, no pipeline bookkeeping.
    return pl.pallas_call(
        kernel,
        out_shape=jax.ShapeDtypeStruct((B, n_state), jnp.float32),
        in_specs=[vmem(), vmem(), vmem()],
        out_specs=vmem(),
    )(x, wpack, vpack)


def state_classifier_forward(x, prep):
    """Per-call path is exactly one Pallas kernel launch (packing hoisted to prepare_params)."""
    return _forward(x, prep["wpack"], prep["vpack"],
                    H=prep["H"], Hp=prep["Hp"],
                    n_state=prep["n_state"], f_rows=prep["f_rows"])


def _reference_forward(x, params):
    """Pure-JAX reference replicating torch semantics (eval-mode BN/Dropout)."""
    B, T, F = x.shape
    H = params["w_hh"].shape[1]
    w_ih, w_hh = params["w_ih"], params["w_hh"]
    b_ih, b_hh = params["b_ih"], params["b_hh"]

    def step(h, x_t):
        gx = x_t @ w_ih.T + b_ih
        gh = h @ w_hh.T + b_hh
        r = jax.nn.sigmoid(gx[:, :H] + gh[:, :H])
        z = jax.nn.sigmoid(gx[:, H:2 * H] + gh[:, H:2 * H])
        n = jnp.tanh(gx[:, 2 * H:] + r * gh[:, 2 * H:])
        h_new = (1.0 - z) * n + z * h
        return h_new, None

    h0 = jnp.zeros((B, H), jnp.float32)
    h_final, _ = lax.scan(step, h0, jnp.transpose(x, (1, 0, 2)))
    eps = 1e-5
    xh = (h_final - params["bn_mean"]) / jnp.sqrt(params["bn_var"] + eps)
    xh = xh * params["bn_gamma"] + params["bn_beta"]
    xh = jnp.maximum(xh, 0.0)
    return xh @ params["w_lin"].T + params["b_lin"]


def make_params(key, feature_size, hidden_size, n_state):
    H = hidden_size
    k = jax.random.split(key, 6)
    scale = 1.0 / jnp.sqrt(jnp.float32(H))
    u = lambda kk, shape: jax.random.uniform(kk, shape, jnp.float32, -scale, scale)
    return {
        "w_ih": u(k[0], (3 * H, feature_size)),   # stacked [r, z, n]
        "w_hh": u(k[1], (3 * H, H)),
        "b_ih": u(k[2], (3 * H,)),
        "b_hh": u(k[3], (3 * H,)),
        # BatchNorm1d params (deterministic, non-trivial values), eval-mode stats.
        "bn_gamma": jnp.linspace(0.5, 1.5, H, dtype=jnp.float32),
        "bn_beta": jnp.linspace(-0.1, 0.1, H, dtype=jnp.float32),
        "bn_mean": jnp.zeros((H,), jnp.float32),
        "bn_var": jnp.ones((H,), jnp.float32),
        "w_lin": u(k[4], (n_state, H)),
        "b_lin": u(k[5], (n_state,)),
    }


if __name__ == "__main__":
    # Small shapes consistent with StateClassifier(feature_size=4, n_state=4, hidden_size=32).
    B, T, F, H, N_STATE = 2, 8, 4, 32, 4

    key = jax.random.PRNGKey(0)
    kx, kp = jax.random.split(key)
    x = jax.random.normal(kx, (B, T, F), dtype=jnp.float32)
    params = make_params(kp, F, H, N_STATE)

    prep = prepare_params(params)            # one-time packing, hoisted out of the forward
    out = state_classifier_forward(x, prep)  # single pallas_call per forward
    out = jax.block_until_ready(out)

    ref = _reference_forward(x, params)
    assert out.shape == (B, N_STATE)
    assert jnp.allclose(out, ref, atol=1e-5, rtol=1e-5), (out, ref)

    # TODO(synk): Dropout/BatchNorm use deterministic eval-mode semantics (no train-mode
    # batch stats / random masking), matching module.eval() inference behavior.
    print("KERNEL_OK")
</pallas_src>

<mosaic_0001>
module attributes {stable_mosaic.version = 11 : i64} {
  func.func @_gru_classifier_kernel(%arg0: memref<2x8x4xf32, #tpu.memory_space<vmem>>, %arg1: memref<72x384xf32, #tpu.memory_space<vmem>>, %arg2: memref<8x384xf32, #tpu.memory_space<vmem>>, %arg3: memref<2x4xf32, #tpu.memory_space<vmem>>) attributes {dimension_semantics = [], scalar_prefetch = 0 : i64, scratch_operands = 0 : i64, tpu.core_type = #tpu.core_type<tc>} {
    %c0 = arith.constant 0 : index
    %c0_0 = arith.constant 0 : index
    %0 = vector.load %arg1[%c0, %c0_0] : memref<72x384xf32, #tpu.memory_space<vmem>>, vector<4x384xf32>
    %c8 = arith.constant 8 : index
    %c0_1 = arith.constant 0 : index
    %1 = vector.load %arg1[%c8, %c0_1] : memref<72x384xf32, #tpu.memory_space<vmem>>, vector<32x384xf32>
    %c40 = arith.constant 40 : index
    %c0_2 = arith.constant 0 : index
    %2 = vector.load %arg1[%c40, %c0_2] : memref<72x384xf32, #tpu.memory_space<vmem>>, vector<32x4xf32>
    %c0_3 = arith.constant 0 : index
    %c0_4 = arith.constant 0 : index
    %3 = vector.load %arg2[%c0_3, %c0_4] : memref<8x384xf32, #tpu.memory_space<vmem>>, vector<1x384xf32>
    %c1 = arith.constant 1 : index
    %c0_5 = arith.constant 0 : index
    %4 = vector.load %arg2[%c1, %c0_5] : memref<8x384xf32, #tpu.memory_space<vmem>>, vector<1x384xf32>
    %c2 = arith.constant 2 : index
    %c0_6 = arith.constant 0 : index
    %5 = vector.load %arg2[%c2, %c0_6] : memref<8x384xf32, #tpu.memory_space<vmem>>, vector<1x128xf32>
    %c3 = arith.constant 3 : index
    %c0_7 = arith.constant 0 : index
    %6 = vector.load %arg2[%c3, %c0_7] : memref<8x384xf32, #tpu.memory_space<vmem>>, vector<1x128xf32>
    %c4 = arith.constant 4 : index
    %c0_8 = arith.constant 0 : index
    %7 = vector.load %arg2[%c4, %c0_8] : memref<8x384xf32, #tpu.memory_space<vmem>>, vector<1x4xf32>
    %c0_9 = arith.constant 0 : index
    %c0_10 = arith.constant 0 : index
    %c0_11 = arith.constant 0 : index
    %8 = vector.load %arg0[%c0_9, %c0_10, %c0_11] : memref<2x8x4xf32, #tpu.memory_space<vmem>>, vector<2x8x4xf32>
    %9 = vector.shape_cast %8 : vector<2x8x4xf32> to vector<16x4xf32>
    %cst = arith.constant dense<0.000000e+00> : vector<16x384xf32>
    %10 = tpu.matmul %9, %0, %cst {dimension_numbers = #tpu.dot_dimension_numbers<[1], [0], [0], [1], [0, 0, 1, 1], [], []>} : vector<16x4xf32>, vector<4x384xf32>, vector<16x384xf32> -> vector<16x384xf32>
    %11 = vector.broadcast %3 : vector<1x384xf32> to vector<16x384xf32>
    %12 = arith.addf %10, %11 : vector<16x384xf32>
    %13 = vector.shape_cast %12 : vector<16x384xf32> to vector<2x8x384xf32>
    %14 = tpu.transpose %13, [1, 0, 2] : vector<2x8x384xf32> -> vector<8x2x384xf32>
    %cst_12 = arith.constant 0.000000e+00 : f32
    %15 = vector.broadcast %cst_12 : f32 to vector<2x128xf32>
    %16 = vector.extract_strided_slice %14 {offsets = [0, 0, 0], sizes = [1, 2, 384], strides = [1, 1, 1]} : vector<8x2x384xf32> to vector<1x2x384xf32>
    %17 = vector.shape_cast %16 : vector<1x2x384xf32> to vector<2x384xf32>
    %18 = vector.extract_strided_slice %15 {offsets = [0, 0], sizes = [2, 32], strides = [1, 1]} : vector<2x128xf32> to vector<2x32xf32>
    %cst_13 = arith.constant dense<0.000000e+00> : vector<2x384xf32>
    %19 = tpu.matmul %18, %1, %cst_13 {dimension_numbers = #tpu.dot_dimension_numbers<[1], [0], [0], [1], [0, 0, 1, 1], [], []>} : vector<2x32xf32>, vector<32x384xf32>, vector<2x384xf32> -> vector<2x384xf32>
    %20 = vector.broadcast %4 : vector<1x384xf32> to vector<2x384xf32>
    %21 = arith.addf %19, %20 : vector<2x384xf32>
    %22 = vector.extract_strided_slice %17 {offsets = [0, 0], sizes = [2, 128], strides = [1, 1]} : vector<2x384xf32> to vector<2x128xf32>
    %23 = vector.extract_strided_slice %21 {offsets = [0, 0], sizes = [2, 128], strides = [1, 1]} : vector<2x384xf32> to vector<2x128xf32>
    %24 = arith.addf %22, %23 : vector<2x128xf32>
    %25 = arith.negf %24 : vector<2x128xf32>
    %26 = math.exp %25 : vector<2x128xf32>
    %cst_14 = arith.constant 1.000000e+00 : f32
    %27 = vector.broadcast %cst_14 : f32 to vector<2x128xf32>
    %28 = arith.addf %27, %26 : vector<2x128xf32>
    %29 = arith.divf %27, %28 : vector<2x128xf32>
    %30 = vector.extract_strided_slice %17 {offsets = [0, 128], sizes = [2, 128], strides = [1, 1]} : vector<2x384xf32> to vector<2x128xf32>
    %31 = vector.extract_strided_slice %21 {offsets = [0, 128], sizes = [2, 128], strides = [1, 1]} : vector<2x384xf32> to vector<2x128xf32>
    %32 = arith.addf %30, %31 : vector<2x128xf32>
    %33 = arith.negf %32 : vector<2x128xf32>
    %34 = math.exp %33 : vector<2x128xf32>
    %cst_15 = arith.constant 1.000000e+00 : f32
    %35 = vector.broadcast %cst_15 : f32 to vector<2x128xf32>
    %36 = arith.addf %35, %34 : vector<2x128xf32>
    %37 = arith.divf %35, %36 : vector<2x128xf32>
    %38 = vector.extract_strided_slice %17 {offsets = [0, 256], sizes = [2, 128], strides = [1, 1]} : vector<2x384xf32> to vector<2x128xf32>
    %39 = vector.extract_strided_slice %21 {offsets = [0, 256], sizes = [2, 128], strides = [1, 1]} : vector<2x384xf32> to vector<2x128xf32>
    %40 = arith.mulf %29, %39 : vector<2x128xf32>
    %41 = arith.addf %38, %40 : vector<2x128xf32>
    %42 = math.tanh %41 : vector<2x128xf32>
    %cst_16 = arith.constant 1.000000e+00 : f32
    %43 = vector.broadcast %cst_16 : f32 to vector<2x128xf32>
    %44 = arith.subf %43, %37 : vector<2x128xf32>
    %45 = arith.mulf %44, %42 : vector<2x128xf32>
    %46 = arith.mulf %37, %15 : vector<2x128xf32>
    %47 = arith.addf %45, %46 : vector<2x128xf32>
    %48 = vector.extract_strided_slice %14 {offsets = [1, 0, 0], sizes = [1, 2, 384], strides = [1, 1, 1]} : vector<8x2x384xf32> to vector<1x2x384xf32>
    %49 = vector.shape_cast %48 : vector<1x2x384xf32> to vector<2x384xf32>
    %50 = vector.extract_strided_slice %47 {offsets = [0, 0], sizes = [2, 32], strides = [1, 1]} : vector<2x128xf32> to vector<2x32xf32>
    %cst_17 = arith.constant dense<0.000000e+00> : vector<2x384xf32>
    %51 = tpu.matmul %50, %1, %cst_17 {dimension_numbers = #tpu.dot_dimension_numbers<[1], [0], [0], [1], [0, 0, 1, 1], [], []>} : vector<2x32xf32>, vector<32x384xf32>, vector<2x384xf32> -> vector<2x384xf32>
    %52 = vector.broadcast %4 : vector<1x384xf32> to vector<2x384xf32>
    %53 = arith.addf %51, %52 : vector<2x384xf32>
    %54 = vector.extract_strided_slice %49 {offsets = [0, 0], sizes = [2, 128], strides = [1, 1]} : vector<2x384xf32> to vector<2x128xf32>
    %55 = vector.extract_strided_slice %53 {offsets = [0, 0], sizes = [2, 128], strides = [1, 1]} : vector<2x384xf32> to vector<2x128xf32>
    %56 = arith.addf %54, %55 : vector<2x128xf32>
    %57 = arith.negf %56 : vector<2x128xf32>
    %58 = math.exp %57 : vector<2x128xf32>
    %cst_18 = arith.constant 1.000000e+00 : f32
    %59 = vector.broadcast %cst_18 : f32 to vector<2x128xf32>
    %60 = arith.addf %59, %58 : vector<2x128xf32>
    %61 = arith.divf %59, %60 : vector<2x128xf32>
    %62 = vector.extract_strided_slice %49 {offsets = [0, 128], sizes = [2, 128], strides = [1, 1]} : vector<2x384xf32> to vector<2x128xf32>
    %63 = vector.extract_strided_slice %53 {offsets = [0, 128], sizes = [2, 128], strides = [1, 1]} : vector<2x384xf32> to vector<2x128xf32>
    %64 = arith.addf %62, %63 : vector<2x128xf32>
    %65 = arith.negf %64 : vector<2x128xf32>
    %66 = math.exp %65 : vector<2x128xf32>
    %cst_19 = arith.constant 1.000000e+00 : f32
    %67 = vector.broadcast %cst_19 : f32 to vector<2x128xf32>
    %68 = arith.addf %67, %66 : vector<2x128xf32>
    %69 = arith.divf %67, %68 : vector<2x128xf32>
    %70 = vector.extract_strided_slice %49 {offsets = [0, 256], sizes = [2, 128], strides = [1, 1]} : vector<2x384xf32> to vector<2x128xf32>
    %71 = vector.extract_strided_slice %53 {offsets = [0, 256], sizes = [2, 128], strides = [1, 1]} : vector<2x384xf32> to vector<2x128xf32>
    %72 = arith.mulf %61, %71 : vector<2x128xf32>
    %73 = arith.addf %70, %72 : vector<2x128xf32>
    %74 = math.tanh %73 : vector<2x128xf32>
    %cst_20 = arith.constant 1.000000e+00 : f32
    %75 = vector.broadcast %cst_20 : f32 to vector<2x128xf32>
    %76 = arith.subf %75, %69 : vector<2x128xf32>
    %77 = arith.mulf %76, %74 : vector<2x128xf32>
    %78 = arith.mulf %69, %47 : vector<2x128xf32>
    %79 = arith.addf %77, %78 : vector<2x128xf32>
    %80 = vector.extract_strided_slice %14 {offsets = [2, 0, 0], sizes = [1, 2, 384], strides = [1, 1, 1]} : vector<8x2x384xf32> to vector<1x2x384xf32>
    %81 = vector.shape_cast %80 : vector<1x2x384xf32> to vector<2x384xf32>
    %82 = vector.extract_strided_slice %79 {offsets = [0, 0], sizes = [2, 32], strides = [1, 1]} : vector<2x128xf32> to vector<2x32xf32>
    %cst_21 = arith.constant dense<0.000000e+00> : vector<2x384xf32>
    %83 = tpu.matmul %82, %1, %cst_21 {dimension_numbers = #tpu.dot_dimension_numbers<[1], [0], [0], [1], [0, 0, 1, 1], [], []>} : vector<2x32xf32>, vector<32x384xf32>, vector<2x384xf32> -> vector<2x384xf32>
    %84 = vector.broadcast %4 : vector<1x384xf32> to vector<2x384xf32>
    %85 = arith.addf %83, %84 : vector<2x384xf32>
    %86 = vector.extract_strided_slice %81 {offsets = [0, 0], sizes = [2, 128], strides = [1, 1]} : vector<2x384xf32> to vector<2x128xf32>
    %87 = vector.extract_strided_slice %85 {offsets = [0, 0], sizes = [2, 128], strides = [1, 1]} : vector<2x384xf32> to vector<2x128xf32>
    %88 = arith.addf %86, %87 : vector<2x128xf32>
    %89 = arith.negf %88 : vector<2x128xf32>
    %90 = math.exp %89 : vector<2x128xf32>
    %cst_22 = arith.constant 1.000000e+00 : f32
    %91 = vector.broadcast %cst_22 : f32 to vector<2x128xf32>
    %92 = arith.addf %91, %90 : vector<2x128xf32>
    %93 = arith.divf %91, %92 : vector<2x128xf32>
    %94 = vector.extract_strided_slice %81 {offsets = [0, 128], sizes = [2, 128], strides = [1, 1]} : vector<2x384xf32> to vector<2x128xf32>
    %95 = vector.extract_strided_slice %85 {offsets = [0, 128], sizes = [2, 128], strides = [1, 1]} : vector<2x384xf32> to vector<2x128xf32>
    %96 = arith.addf %94, %95 : vector<2x128xf32>
    %97 = arith.negf %96 : vector<2x128xf32>
    %98 = math.exp %97 : vector<2x128xf32>
    %cst_23 = arith.constant 1.000000e+00 : f32
    %99 = vector.broadcast %cst_23 : f32 to vector<2x128xf32>
    %100 = arith.addf %99, %98 : vector<2x128xf32>
    %101 = arith.divf %99, %100 : vector<2x128xf32>
    %102 = vector.extract_strided_slice %81 {offsets = [0, 256], sizes = [2, 128], strides = [1, 1]} : vector<2x384xf32> to vector<2x128xf32>
    %103 = vector.extract_strided_slice %85 {offsets = [0, 256], sizes = [2, 128], strides = [1, 1]} : vector<2x384xf32> to vector<2x128xf32>
    %104 = arith.mulf %93, %103 : vector<2x128xf32>
    %105 = arith.addf %102, %104 : vector<2x128xf32>
    %106 = math.tanh %105 : vector<2x128xf32>
    %cst_24 = arith.constant 1.000000e+00 : f32
    %107 = vector.broadcast %cst_24 : f32 to vector<2x128xf32>
    %108 = arith.subf %107, %101 : vector<2x128xf32>
    %109 = arith.mulf %108, %106 : vector<2x128xf32>
    %110 = arith.mulf %101, %79 : vector<2x128xf32>
    %111 = arith.addf %109, %110 : vector<2x128xf32>
    %112 = vector.extract_strided_slice %14 {offsets = [3, 0, 0], sizes = [1, 2, 384], strides = [1, 1, 1]} : vector<8x2x384xf32> to vector<1x2x384xf32>
    %113 = vector.shape_cast %112 : vector<1x2x384xf32> to vector<2x384xf32>
    %114 = vector.extract_strided_slice %111 {offsets = [0, 0], sizes = [2, 32], strides = [1, 1]} : vector<2x128xf32> to vector<2x32xf32>
    %cst_25 = arith.constant dense<0.000000e+00> : vector<2x384xf32>
    %115 = tpu.matmul %114, %1, %cst_25 {dimension_numbers = #tpu.dot_dimension_numbers<[1], [0], [0], [1], [0, 0, 1, 1], [], []>} : vector<2x32xf32>, vector<32x384xf32>, vector<2x384xf32> -> vector<2x384xf32>
    %116 = vector.broadcast %4 : vector<1x384xf32> to vector<2x384xf32>
    %117 = arith.addf %115, %116 : vector<2x384xf32>
    %118 = vector.extract_strided_slice %113 {offsets = [0, 0], sizes = [2, 128], strides = [1, 1]} : vector<2x384xf32> to vector<2x128xf32>
    %119 = vector.extract_strided_slice %117 {offsets = [0, 0], sizes = [2, 128], strides = [1, 1]} : vector<2x384xf32> to vector<2x128xf32>
    %120 = arith.addf %118, %119 : vector<2x128xf32>
    %121 = arith.negf %120 : vector<2x128xf32>
    %122 = math.exp %121 : vector<2x128xf32>
    %cst_26 = arith.constant 1.000000e+00 : f32
    %123 = vector.broadcast %cst_26 : f32 to vector<2x128xf32>
    %124 = arith.addf %123, %122 : vector<2x128xf32>
    %125 = arith.divf %123, %124 : vector<2x128xf32>
    %126 = vector.extract_strided_slice %113 {offsets = [0, 128], sizes = [2, 128], strides = [1, 1]} : vector<2x384xf32> to vector<2x128xf32>
    %127 = vector.extract_strided_slice %117 {offsets = [0, 128], sizes = [2, 128], strides = [1, 1]} : vector<2x384xf32> to vector<2x128xf32>
    %128 = arith.addf %126, %127 : vector<2x128xf32>
    %129 = arith.negf %128 : vector<2x128xf32>
    %130 = math.exp %129 : vector<2x128xf32>
    %cst_27 = arith.constant 1.000000e+00 : f32
    %131 = vector.broadcast %cst_27 : f32 to vector<2x128xf32>
    %132 = arith.addf %131, %130 : vector<2x128xf32>
    %133 = arith.divf %131, %132 : vector<2x128xf32>
    %134 = vector.extract_strided_slice %113 {offsets = [0, 256], sizes = [2, 128], strides = [1, 1]} : vector<2x384xf32> to vector<2x128xf32>
    %135 = vector.extract_strided_slice %117 {offsets = [0, 256], sizes = [2, 128], strides = [1, 1]} : vector<2x384xf32> to vector<2x128xf32>
    %136 = arith.mulf %125, %135 : vector<2x128xf32>
    %137 = arith.addf %134, %136 : vector<2x128xf32>
    %138 = math.tanh %137 : vector<2x128xf32>
    %cst_28 = arith.constant 1.000000e+00 : f32
    %139 = vector.broadcast %cst_28 : f32 to vector<2x128xf32>
    %140 = arith.subf %139, %133 : vector<2x128xf32>
    %141 = arith.mulf %140, %138 : vector<2x128xf32>
    %142 = arith.mulf %133, %111 : vector<2x128xf32>
    %143 = arith.addf %141, %142 : vector<2x128xf32>
    %144 = vector.extract_strided_slice %14 {offsets = [4, 0, 0], sizes = [1, 2, 384], strides = [1, 1, 1]} : vector<8x2x384xf32> to vector<1x2x384xf32>
    %145 = vector.shape_cast %144 : vector<1x2x384xf32> to vector<2x384xf32>
    %146 = vector.extract_strided_slice %143 {offsets = [0, 0], sizes = [2, 32], strides = [1, 1]} : vector<2x128xf32> to vector<2x32xf32>
    %cst_29 = arith.constant dense<0.000000e+00> : vector<2x384xf32>
    %147 = tpu.matmul %146, %1, %cst_29 {dimension_numbers = #tpu.dot_dimension_numbers<[1], [0], [0], [1], [0, 0, 1, 1], [], []>} : vector<2x32xf32>, vector<32x384xf32>, vector<2x384xf32> -> vector<2x384xf32>
    %148 = vector.broadcast %4 : vector<1x384xf32> to vector<2x384xf32>
    %149 = arith.addf %147, %148 : vector<2x384xf32>
    %150 = vector.extract_strided_slice %145 {offsets = [0, 0], sizes = [2, 128], strides = [1, 1]} : vector<2x384xf32> to vector<2x128xf32>
    %151 = vector.extract_strided_slice %149 {offsets = [0, 0], sizes = [2, 128], strides = [1, 1]} : vector<2x384xf32> to vector<2x128xf32>
    %152 = arith.addf %150, %151 : vector<2x128xf32>
    %153 = arith.negf %152 : vector<2x128xf32>
    %154 = math.exp %153 : vector<2x128xf32>
    %cst_30 = arith.constant 1.000000e+00 : f32
    %155 = vector.broadcast %cst_30 : f32 to vector<2x128xf32>
    %156 = arith.addf %155, %154 : vector<2x128xf32>
    %157 = arith.divf %155, %156 : vector<2x128xf32>
    %158 = vector.extract_strided_slice %145 {offsets = [0, 128], sizes = [2, 128], strides = [1, 1]} : vector<2x384xf32> to vector<2x128xf32>
    %159 = vector.extract_strided_slice %149 {offsets = [0, 128], sizes = [2, 128], strides = [1, 1]} : vector<2x384xf32> to vector<2x128xf32>
    %160 = arith.addf %158, %159 : vector<2x128xf32>
    %161 = arith.negf %160 : vector<2x128xf32>
    %162 = math.exp %161 : vector<2x128xf32>
    %cst_31 = arith.constant 1.000000e+00 : f32
    %163 = vector.broadcast %cst_31 : f32 to vector<2x128xf32>
    %164 = arith.addf %163, %162 : vector<2x128xf32>
    %165 = arith.divf %163, %164 : vector<2x128xf32>
    %166 = vector.extract_strided_slice %145 {offsets = [0, 256], sizes = [2, 128], strides = [1, 1]} : vector<2x384xf32> to vector<2x128xf32>
    %167 = vector.extract_strided_slice %149 {offsets = [0, 256], sizes = [2, 128], strides = [1, 1]} : vector<2x384xf32> to vector<2x128xf32>
    %168 = arith.mulf %157, %167 : vector<2x128xf32>
    %169 = arith.addf %166, %168 : vector<2x128xf32>
    %170 = math.tanh %169 : vector<2x128xf32>
    %cst_32 = arith.constant 1.000000e+00 : f32
    %171 = vector.broadcast %cst_32 : f32 to vector<2x128xf32>
    %172 = arith.subf %171, %165 : vector<2x128xf32>
    %173 = arith.mulf %172, %170 : vector<2x128xf32>
    %174 = arith.mulf %165, %143 : vector<2x128xf32>
    %175 = arith.addf %173, %174 : vector<2x128xf32>
    %176 = vector.extract_strided_slice %14 {offsets = [5, 0, 0], sizes = [1, 2, 384], strides = [1, 1, 1]} : vector<8x2x384xf32> to vector<1x2x384xf32>
    %177 = vector.shape_cast %176 : vector<1x2x384xf32> to vector<2x384xf32>
    %178 = vector.extract_strided_slice %175 {offsets = [0, 0], sizes = [2, 32], strides = [1, 1]} : vector<2x128xf32> to vector<2x32xf32>
    %cst_33 = arith.constant dense<0.000000e+00> : vector<2x384xf32>
    %179 = tpu.matmul %178, %1, %cst_33 {dimension_numbers = #tpu.dot_dimension_numbers<[1], [0], [0], [1], [0, 0, 1, 1], [], []>} : vector<2x32xf32>, vector<32x384xf32>, vector<2x384xf32> -> vector<2x384xf32>
    %180 = vector.broadcast %4 : vector<1x384xf32> to vector<2x384xf32>
    %181 = arith.addf %179, %180 : vector<2x384xf32>
    %182 = vector.extract_strided_slice %177 {offsets = [0, 0], sizes = [2, 128], strides = [1, 1]} : vector<2x384xf32> to vector<2x128xf32>
    %183 = vector.extract_strided_slice %181 {offsets = [0, 0], sizes = [2, 128], strides = [1, 1]} : vector<2x384xf32> to vector<2x128xf32>
    %184 = arith.addf %182, %183 : vector<2x128xf32>
    %185 = arith.negf %184 : vector<2x128xf32>
    %186 = math.exp %185 : vector<2x128xf32>
    %cst_34 = arith.constant 1.000000e+00 : f32
    %187 = vector.broadcast %cst_34 : f32 to vector<2x128xf32>
    %188 = arith.addf %187, %186 : vector<2x128xf32>
    %189 = arith.divf %187, %188 : vector<2x128xf32>
    %190 = vector.extract_strided_slice %177 {offsets = [0, 128], sizes = [2, 128], strides = [1, 1]} : vector<2x384xf32> to vector<2x128xf32>
    %191 = vector.extract_strided_slice %181 {offsets = [0, 128], sizes = [2, 128], strides = [1, 1]} : vector<2x384xf32> to vector<2x128xf32>
    %192 = arith.addf %190, %191 : vector<2x128xf32>
    %193 = arith.negf %192 : vector<2x128xf32>
    %194 = math.exp %193 : vector<2x128xf32>
    %cst_35 = arith.constant 1.000000e+00 : f32
    %195 = vector.broadcast %cst_35 : f32 to vector<2x128xf32>
    %196 = arith.addf %195, %194 : vector<2x128xf32>
    %197 = arith.divf %195, %196 : vector<2x128xf32>
    %198 = vector.extract_strided_slice %177 {offsets = [0, 256], sizes = [2, 128], strides = [1, 1]} : vector<2x384xf32> to vector<2x128xf32>
    %199 = vector.extract_strided_slice %181 {offsets = [0, 256], sizes = [2, 128], strides = [1, 1]} : vector<2x384xf32> to vector<2x128xf32>
    %200 = arith.mulf %189, %199 : vector<2x128xf32>
    %201 = arith.addf %198, %200 : vector<2x128xf32>
    %202 = math.tanh %201 : vector<2x128xf32>
    %cst_36 = arith.constant 1.000000e+00 : f32
    %203 = vector.broadcast %cst_36 : f32 to vector<2x128xf32>
    %204 = arith.subf %203, %197 : vector<2x128xf32>
    %205 = arith.mulf %204, %202 : vector<2x128xf32>
    %206 = arith.mulf %197, %175 : vector<2x128xf32>
    %207 = arith.addf %205, %206 : vector<2x128xf32>
    %208 = vector.extract_strided_slice %14 {offsets = [6, 0, 0], sizes = [1, 2, 384], strides = [1, 1, 1]} : vector<8x2x384xf32> to vector<1x2x384xf32>
    %209 = vector.shape_cast %208 : vector<1x2x384xf32> to vector<2x384xf32>
    %210 = vector.extract_strided_slice %207 {offsets = [0, 0], sizes = [2, 32], strides = [1, 1]} : vector<2x128xf32> to vector<2x32xf32>
    %cst_37 = arith.constant dense<0.000000e+00> : vector<2x384xf32>
    %211 = tpu.matmul %210, %1, %cst_37 {dimension_numbers = #tpu.dot_dimension_numbers<[1], [0], [0], [1], [0, 0, 1, 1], [], []>} : vector<2x32xf32>, vector<32x384xf32>, vector<2x384xf32> -> vector<2x384xf32>
    %212 = vector.broadcast %4 : vector<1x384xf32> to vector<2x384xf32>
    %213 = arith.addf %211, %212 : vector<2x384xf32>
    %214 = vector.extract_strided_slice %209 {offsets = [0, 0], sizes = [2, 128], strides = [1, 1]} : vector<2x384xf32> to vector<2x128xf32>
    %215 = vector.extract_strided_slice %213 {offsets = [0, 0], sizes = [2, 128], strides = [1, 1]} : vector<2x384xf32> to vector<2x128xf32>
    %216 = arith.addf %214, %215 : vector<2x128xf32>
    %217 = arith.negf %216 : vector<2x128xf32>
    %218 = math.exp %217 : vector<2x128xf32>
    %cst_38 = arith.constant 1.000000e+00 : f32
    %219 = vector.broadcast %cst_38 : f32 to vector<2x128xf32>
    %220 = arith.addf %219, %218 : vector<2x128xf32>
    %221 = arith.divf %219, %220 : vector<2x128xf32>
    %222 = vector.extract_strided_slice %209 {offsets = [0, 128], sizes = [2, 128], strides = [1, 1]} : vector<2x384xf32> to vector<2x128xf32>
    %223 = vector.extract_strided_slice %213 {offsets = [0, 128], sizes = [2, 128], strides = [1, 1]} : vector<2x384xf32> to vector<2x128xf32>
    %224 = arith.addf %222, %223 : vector<2x128xf32>
    %225 = arith.negf %224 : vector<2x128xf32>
    %226 = math.exp %225 : vector<2x128xf32>
    %cst_39 = arith.constant 1.000000e+00 : f32
    %227 = vector.broadcast %cst_39 : f32 to vector<2x128xf32>
    %228 = arith.addf %227, %226 : vector<2x128xf32>
    %229 = arith.divf %227, %228 : vector<2x128xf32>
    %230 = vector.extract_strided_slice %209 {offsets = [0, 256], sizes = [2, 128], strides = [1, 1]} : vector<2x384xf32> to vector<2x128xf32>
    %231 = vector.extract_strided_slice %213 {offsets = [0, 256], sizes = [2, 128], strides = [1, 1]} : vector<2x384xf32> to vector<2x128xf32>
    %232 = arith.mulf %221, %231 : vector<2x128xf32>
    %233 = arith.addf %230, %232 : vector<2x128xf32>
    %234 = math.tanh %233 : vector<2x128xf32>
    %cst_40 = arith.constant 1.000000e+00 : f32
    %235 = vector.broadcast %cst_40 : f32 to vector<2x128xf32>
    %236 = arith.subf %235, %229 : vector<2x128xf32>
    %237 = arith.mulf %236, %234 : vector<2x128xf32>
    %238 = arith.mulf %229, %207 : vector<2x128xf32>
    %239 = arith.addf %237, %238 : vector<2x128xf32>
    %240 = vector.extract_strided_slice %14 {offsets = [7, 0, 0], sizes = [1, 2, 384], strides = [1, 1, 1]} : vector<8x2x384xf32> to vector<1x2x384xf32>
    %241 = vector.shape_cast %240 : vector<1x2x384xf32> to vector<2x384xf32>
    %242 = vector.extract_strided_slice %239 {offsets = [0, 0], sizes = [2, 32], strides = [1, 1]} : vector<2x128xf32> to vector<2x32xf32>
    %cst_41 = arith.constant dense<0.000000e+00> : vector<2x384xf32>
    %243 = tpu.matmul %242, %1, %cst_41 {dimension_numbers = #tpu.dot_dimension_numbers<[1], [0], [0], [1], [0, 0, 1, 1], [], []>} : vector<2x32xf32>, vector<32x384xf32>, vector<2x384xf32> -> vector<2x384xf32>
    %244 = vector.broadcast %4 : vector<1x384xf32> to vector<2x384xf32>
    %245 = arith.addf %243, %244 : vector<2x384xf32>
    %246 = vector.extract_strided_slice %241 {offsets = [0, 0], sizes = [2, 128], strides = [1, 1]} : vector<2x384xf32> to vector<2x128xf32>
    %247 = vector.extract_strided_slice %245 {offsets = [0, 0], sizes = [2, 128], strides = [1, 1]} : vector<2x384xf32> to vector<2x128xf32>
    %248 = arith.addf %246, %247 : vector<2x128xf32>
    %249 = arith.negf %248 : vector<2x128xf32>
    %250 = math.exp %249 : vector<2x128xf32>
    %cst_42 = arith.constant 1.000000e+00 : f32
    %251 = vector.broadcast %cst_42 : f32 to vector<2x128xf32>
    %252 = arith.addf %251, %250 : vector<2x128xf32>
    %253 = arith.divf %251, %252 : vector<2x128xf32>
    %254 = vector.extract_strided_slice %241 {offsets = [0, 128], sizes = [2, 128], strides = [1, 1]} : vector<2x384xf32> to vector<2x128xf32>
    %255 = vector.extract_strided_slice %245 {offsets = [0, 128], sizes = [2, 128], strides = [1, 1]} : vector<2x384xf32> to vector<2x128xf32>
    %256 = arith.addf %254, %255 : vector<2x128xf32>
    %257 = arith.negf %256 : vector<2x128xf32>
    %258 = math.exp %257 : vector<2x128xf32>
    %cst_43 = arith.constant 1.000000e+00 : f32
    %259 = vector.broadcast %cst_43 : f32 to vector<2x128xf32>
    %260 = arith.addf %259, %258 : vector<2x128xf32>
    %261 = arith.divf %259, %260 : vector<2x128xf32>
    %262 = vector.extract_strided_slice %241 {offsets = [0, 256], sizes = [2, 128], strides = [1, 1]} : vector<2x384xf32> to vector<2x128xf32>
    %263 = vector.extract_strided_slice %245 {offsets = [0, 256], sizes = [2, 128], strides = [1, 1]} : vector<2x384xf32> to vector<2x128xf32>
    %264 = arith.mulf %253, %263 : vector<2x128xf32>
    %265 = arith.addf %262, %264 : vector<2x128xf32>
    %266 = math.tanh %265 : vector<2x128xf32>
    %cst_44 = arith.constant 1.000000e+00 : f32
    %267 = vector.broadcast %cst_44 : f32 to vector<2x128xf32>
    %268 = arith.subf %267, %261 : vector<2x128xf32>
    %269 = arith.mulf %268, %266 : vector<2x128xf32>
    %270 = arith.mulf %261, %239 : vector<2x128xf32>
    %271 = arith.addf %269, %270 : vector<2x128xf32>
    %272 = vector.broadcast %5 : vector<1x128xf32> to vector<2x128xf32>
    %273 = arith.mulf %271, %272 : vector<2x128xf32>
    %274 = vector.broadcast %6 : vector<1x128xf32> to vector<2x128xf32>
    %275 = arith.addf %273, %274 : vector<2x128xf32>
    %cst_45 = arith.constant 0.000000e+00 : f32
    %276 = vector.broadcast %cst_45 : f32 to vector<2x128xf32>
    %277 = arith.maximumf %275, %276 : vector<2x128xf32>
    %278 = vector.extract_strided_slice %277 {offsets = [0, 0], sizes = [2, 32], strides = [1, 1]} : vector<2x128xf32> to vector<2x32xf32>
    %cst_46 = arith.constant dense<0.000000e+00> : vector<2x4xf32>
    %279 = tpu.matmul %278, %2, %cst_46 {dimension_numbers = #tpu.dot_dimension_numbers<[1], [0], [0], [1], [0, 0, 1, 1], [], []>} : vector<2x32xf32>, vector<32x4xf32>, vector<2x4xf32> -> vector<2x4xf32>
    %280 = vector.broadcast %7 : vector<1x4xf32> to vector<2x4xf32>
    %281 = arith.addf %279, %280 : vector<2x4xf32>
    %c0_47 = arith.constant 0 : index
    %c0_48 = arith.constant 0 : index
    %282 = vector.load %arg3[%c0_47, %c0_48] : memref<2x4xf32, #tpu.memory_space<vmem>>, vector<2x4xf32>
    tpu.vector_store %arg3[%c0_47, %c0_48], %281 {strides = array<i32>} : memref<2x4xf32, #tpu.memory_space<vmem>>, vector<2x4xf32>,
    return
  }
}

</mosaic_0001>

<llo_original>
// kernel: _forward.1
$region0: #{_forward.1}
  #allocation0 [shape = 'u32[]', space=smem, size = 0x4, offset = 0x4, fixed_abs, tag = 'smem constant byte address 0x4 - core index']
  #allocation1 [shape = 'u32[72,128]{1,0:T(1,128)}', space=vmem, size = 0x9000, scoped, tag = 'internal scratch']
  %s0 = inlined_call_operand.vmem [shape: f32[2,8,4], index: 0, kind: input, shape index: {}]
  %s1 = inlined_call_operand.hbm [shape: f32[72,384], index: 1, kind: input, shape index: {}]
  %s2 = inlined_call_operand.vmem [shape: f32[8,384], index: 2, kind: input, shape index: {}]
  %s3 = inlined_call_operand.hbm [shape: f32[2,4], index: 3, kind: output, shape index: {}]
  %s4 = sld [smem:[#allocation0]]
  $region26: #{_forward.1} parent=0
    _
  %s6 = ssub.s32 1, %s4
  %s7 = scalar_select 0, %s6, %s4
  $region1: #{_forward.1} parent=0
    #allocation2 [shape = 'u8[110592]{0}', space=vmem, size = 0x1b000, scoped, tag = 'input window, operand 1, single buffered']
    #allocation3 [shape = 's32[1]{0}', space=sflag, size = 0x4, scoped, tag = 'scoped memory for _forward.1']
    #allocation4 [shape = 's32[1]{0}', space=sflag, size = 0x4, scoped, tag = 'scoped memory for _forward.1']
    #allocation5 [shape = 'u8[1024]{0}', space=vmem, size = 0x400, scoped, tag = 'output window, operand 0, single buffered']
    %8 = vsyncpa [#allocation3], 0
    %9 = vsyncpa [#allocation4], 0
    // Predicated region
    $region2: #{_forward.1} parent=1 // pred_check
      _
    $region3: #{_forward.1} parent=1 // pred_check_branch
      %11 = sbr.rel (0) target = $region5
    $region4: #{_forward.1} parent=1 // pred_region
      _
    $region5: #{_forward.1} parent=1 // pred_fallthru
      _
    // Predicated region
    $region6: #{_forward.1} parent=1 // pred_check
      _
    $region7: #{_forward.1} parent=1 // pred_check_branch
      %13 = sbr.rel (0) target = $region9
    $region8: #{_forward.1} parent=1 // pred_region
      %15 = vsyncadd [#allocation3], 0
      %s16 = sshll.u32 %s1, 4
      %s17 = int_to_ptr.hbm [resolvable:$true] %s16
      %s18 = sshll.u32 [#allocation2], 4
      %s19 = int_to_ptr.vmem [resolvable:$true] %s18
      %24 = dma.hbm_to_vmem [thread:$0]  %s17, 3456, %s19, [#allocation3], 384, 384, 24
    $region9: #{_forward.1} parent=1 // pred_fallthru
      _
    // Predicated region
    $region10: #{_forward.1} parent=1 // pred_check
      _
    $region11: #{_forward.1} parent=1 // pred_check_branch
      %26 = sbr.rel (0) target = $region13
    $region12: #{_forward.1} parent=1 // pred_region
      _
    $region13: #{_forward.1} parent=1 // pred_fallthru
      _
    // Predicated region
    $region14: #{_forward.1} parent=1 // pred_check
      _
    $region15: #{_forward.1} parent=1 // pred_check_branch
      %28 = sbr.rel (0) target = $region17
    $region16: #{_forward.1} parent=1 // pred_region
      %30 = dma.done [#allocation3], 3456
    $region17: #{_forward.1} parent=1 // pred_fallthru
      _
    %v31 = vld [vmem:[#allocation2] sm:$0xf]
    %v32 = vld [vmem:[#allocation2 + $0x8] sm:$0xf]
    %v33 = vld [vmem:[#allocation2 + $0x10] sm:$0xf]
    %v34 = vld [vmem:[#allocation2 + $0x18] sm:$0xff]
    %v35 = vld [vmem:[#allocation2 + $0x20] sm:$0xff]
    %v36 = vld [vmem:[#allocation2 + $0x28] sm:$0xff]
    %v37 = vld [vmem:[#allocation2 + $0x30] sm:$0xff]
    %v38 = vld [vmem:[#allocation2 + $0x38] sm:$0xff]
    %v39 = vld [vmem:[#allocation2 + $0x40] sm:$0xff]
    %v40 = vld [vmem:[#allocation2 + $0x48] sm:$0xff]
    %v41 = vld [vmem:[#allocation2 + $0x50] sm:$0xff]
    %v42 = vld [vmem:[#allocation2 + $0x58] sm:$0xff]
    %v43 = vld [vmem:[#allocation2 + $0x60] sm:$0xff]
    %v44 = vld [vmem:[#allocation2 + $0x68] sm:$0xff]
    %v45 = vld [vmem:[#allocation2 + $0x70] sm:$0xff]
    %v46 = vld [vmem:[#allocation2 + $0x78] sm:$0xff]
    %v47 = vld [vmem:[#allocation2 + $0x90] sm:$0xff]
    %v48 = vld [vmem:[#allocation2 + $0xa8] sm:$0xff]
    %v49 = vld [vmem:[#allocation2 + $0xc0] sm:$0xff]
    %v50 = vld [vmem:[%s2] ss:$8 sm:$0x7]
    %s51 = scalar_lea.vmem %s2, 1
    %v52 = vld [vmem:[%s51] ss:$8 sm:$0x7]
    %v53 = vld [vmem:[%s2 + $0x2] ss:$0 sm:$0xff]
    %v54 = vld [vmem:[%s2 + $0x3] ss:$0 sm:$0xff]
    %v55 = vld [vmem:[%s2 + $0x4] ss:$0 sm:$0xff]
    %v56 = vld [vmem:[%s0] sm:$0xff]
    %v57 = vld [vmem:[%s0 + $0x8] sm:$0xff]
    %v59 = vperm.slane %v50, 0
    %v60 = vperm.slane %v50, 1
    %v61 = vperm.slane %v50, 2
    %vm65 = vcmask 31744
    %v67 = vsel %vm65, %v56, 0
    %v70 = vsel %vm65, %v57, 0
    %vm72 = vcmask 1043456
    %v74 = vsel %vm72, %v31, 0
    %v77 = vsel %vm72, %v32, 0
    %v80 = vsel %vm72, %v33, 0
    %82 = vmatpush.msra.mxu0 0.0
    %83 = vmatpush.msra.mxu0 0.0
    %84 = vmatpush.msra.mxu0 0.0
    %85 = vmatpush.msra.mxu0 0.0
    %86 = vmatpush.msra.mxu0 0.0
    %87 = vmatpush.msra.mxu0 0.0
    %88 = vmatpush.msra.mxu0 0.0
    %89 = vmatpush.msra.mxu0 0.0
    %90 = vmatpush.msra.mxu0 0.0
    %91 = vmatpush.msra.mxu0 0.0
    %92 = vmatpush.msra.mxu0 0.0
    %93 = vmatpush.msra.mxu0 0.0
    %94 = vmatpush.msra.mxu0 0.0
    %95 = vmatpush.msra.mxu0 0.0
    %96 = vmatpush.msra.mxu0 0.0
    %97 = vmatpush.msra.mxu0 %v74
    %98 = vmatmul.f32.gmra.mxu0 %v67
    %v99 = vpop.f32.mrf.mxu0
    %v100 = vadd.f32 %v59, %v99
    %101 = vmatmul.f32.gmra.mxu0 %v70
    %v102 = vpop.f32.mrf.mxu0
    %v103 = vadd.f32 %v59, %v102
    %104 = vdwg.mxu0
    %105 = vmatpush.msra.mxu0 0.0
    %106 = vmatpush.msra.mxu0 0.0
    %107 = vmatpush.msra.mxu0 0.0
    %108 = vmatpush.msra.mxu0 0.0
    %109 = vmatpush.msra.mxu0 0.0
    %110 = vmatpush.msra.mxu0 0.0
    %111 = vmatpush.msra.mxu0 0.0
    %112 = vmatpush.msra.mxu0 0.0
    %113 = vmatpush.msra.mxu0 0.0
    %114 = vmatpush.msra.mxu0 0.0
    %115 = vmatpush.msra.mxu0 0.0
    %116 = vmatpush.msra.mxu0 0.0
    %117 = vmatpush.msra.mxu0 0.0
    %118 = vmatpush.msra.mxu0 0.0
    %119 = vmatpush.msra.mxu0 0.0
    %120 = vmatpush.msra.mxu0 %v77
    %121 = vmatmul.f32.gmra.mxu0 %v67
    %v122 = vpop.f32.mrf.mxu0
    %v123 = vadd.f32 %v60, %v122
    %124 = vmatmul.f32.gmra.mxu0 %v70
    %v125 = vpop.f32.mrf.mxu0
    %v126 = vadd.f32 %v60, %v125
    %127 = vdwg.mxu0
    %128 = vmatpush.msra.mxu0 0.0
    %129 = vmatpush.msra.mxu0 0.0
    %130 = vmatpush.msra.mxu0 0.0
    %131 = vmatpush.msra.mxu0 0.0
    %132 = vmatpush.msra.mxu0 0.0
    %133 = vmatpush.msra.mxu0 0.0
    %134 = vmatpush.msra.mxu0 0.0
    %135 = vmatpush.msra.mxu0 0.0
    %136 = vmatpush.msra.mxu0 0.0
    %137 = vmatpush.msra.mxu0 0.0
    %138 = vmatpush.msra.mxu0 0.0
    %139 = vmatpush.msra.mxu0 0.0
    %140 = vmatpush.msra.mxu0 0.0
    %141 = vmatpush.msra.mxu0 0.0
    %142 = vmatpush.msra.mxu0 0.0
    %143 = vmatpush.msra.mxu0 %v80
    %144 = vmatmul.f32.gmra.mxu0 %v67
    %v145 = vpop.f32.mrf.mxu0
    %v146 = vadd.f32 %v61, %v145
    %147 = vmatmul.f32.gmra.mxu0 %v70
    %v148 = vpop.f32.mrf.mxu0
    %v149 = vadd.f32 %v61, %v148
    %150 = vdwg.mxu0
    %v151 = vrot.slane %v100, 4
    %vm152 = vcmask 1047556
    %v153 = vsel %vm152, 0.0, %v151
    %v155 = vunpack.c.l.s4 1983009808
    %v156 = vunpack.c.0.s8 %v155
    %v157 = vperm.slane %v100, %v156
    %v159 = vunpack.c.l.s4 1983009808
    %v160 = vunpack.c.0.s8 %v159
    %v161 = vperm.slane %v153, %v160
    %v162 = vrot.slane %v103, 4
    %v163 = vsel %vm152, 0.0, %v162
    %v165 = vunpack.c.l.s4 1983009808
    %v166 = vunpack.c.0.s8 %v165
    %v167 = vperm.slane %v103, %v166
    %v169 = vunpack.c.l.s4 1983009808
    %v170 = vunpack.c.0.s8 %v169
    %v171 = vperm.slane %v163, %v170
    %v172 = vrot.slane %v167, 4
    %v173 = vsel %vm152, %v172, %v157
    %v174 = vrot.slane %v157, 4
    %v175 = vsel %vm152, %v167, %v174
    %v177 = vunpack.c.l.s4 1934713408
    %v178 = vunpack.c.0.s8 %v177
    %v179 = vperm.slane %v173, %v178
    %v181 = vunpack.c.l.s4 1934713408
    %v182 = vunpack.c.0.s8 %v181
    %v183 = vperm.slane %v175, %v182
    %v184 = vrot.slane %v171, 4
    %v185 = vsel %vm152, %v184, %v161
    %v186 = vrot.slane %v161, 4
    %v187 = vsel %vm152, %v171, %v186
    %v189 = vunpack.c.l.s4 1934713408
    %v190 = vunpack.c.0.s8 %v189
    %v191 = vperm.slane %v185, %v190
    %v193 = vunpack.c.l.s4 1934713408
    %v194 = vunpack.c.0.s8 %v193
    %v195 = vperm.slane %v187, %v194
    %v196 = vrot.slane %v179, 4
    %v197 = vsel %vm152, 0.0, %v196
    %v198 = vrot.slane %v183, 4
    %v199 = vsel %vm152, 0.0, %v198
    %v200 = vrot.slane %v191, 4
    %v201 = vsel %vm152, 0.0, %v200
    %v202 = vrot.slane %v195, 4
    %v203 = vsel %vm152, 0.0, %v202
    %v204 = vrot.slane %v123, 4
    %v205 = vsel %vm152, 0.0, %v204
    %v207 = vunpack.c.l.s4 1983009808
    %v208 = vunpack.c.0.s8 %v207
    %v209 = vperm.slane %v123, %v208
    %v211 = vunpack.c.l.s4 1983009808
    %v212 = vunpack.c.0.s8 %v211
    %v213 = vperm.slane %v205, %v212
    %v214 = vrot.slane %v126, 4
    %v215 = vsel %vm152, 0.0, %v214
    %v217 = vunpack.c.l.s4 1983009808
    %v218 = vunpack.c.0.s8 %v217
    %v219 = vperm.slane %v126, %v218
    %v221 = vunpack.c.l.s4 1983009808
    %v222 = vunpack.c.0.s8 %v221
    %v223 = vperm.slane %v215, %v222
    %v224 = vrot.slane %v219, 4
    %v225 = vsel %vm152, %v224, %v209
    %v226 = vrot.slane %v209, 4
    %v227 = vsel %vm152, %v219, %v226
    %v229 = vunpack.c.l.s4 1934713408
    %v230 = vunpack.c.0.s8 %v229
    %v231 = vperm.slane %v225, %v230
    %v233 = vunpack.c.l.s4 1934713408
    %v234 = vunpack.c.0.s8 %v233
    %v235 = vperm.slane %v227, %v234
    %v236 = vrot.slane %v223, 4
    %v237 = vsel %vm152, %v236, %v213
    %v238 = vrot.slane %v213, 4
    %v239 = vsel %vm152, %v223, %v238
    %v241 = vunpack.c.l.s4 1934713408
    %v242 = vunpack.c.0.s8 %v241
    %v243 = vperm.slane %v237, %v242
    %v245 = vunpack.c.l.s4 1934713408
    %v246 = vunpack.c.0.s8 %v245
    %v247 = vperm.slane %v239, %v246
    %v248 = vrot.slane %v231, 4
    %v249 = vsel %vm152, 0.0, %v248
    %v250 = vrot.slane %v235, 4
    %v251 = vsel %vm152, 0.0, %v250
    %v252 = vrot.slane %v243, 4
    %v253 = vsel %vm152, 0.0, %v252
    %v254 = vrot.slane %v247, 4
    %v255 = vsel %vm152, 0.0, %v254
    %v256 = vrot.slane %v146, 4
    %v257 = vsel %vm152, 0.0, %v256
    %v259 = vunpack.c.l.s4 1983009808
    %v260 = vunpack.c.0.s8 %v259
    %v261 = vperm.slane %v146, %v260
    %v263 = vunpack.c.l.s4 1983009808
    %v264 = vunpack.c.0.s8 %v263
    %v265 = vperm.slane %v257, %v264
    %v266 = vrot.slane %v149, 4
    %v267 = vsel %vm152, 0.0, %v266
    %v269 = vunpack.c.l.s4 1983009808
    %v270 = vunpack.c.0.s8 %v269
    %v271 = vperm.slane %v149, %v270
    %v273 = vunpack.c.l.s4 1983009808
    %v274 = vunpack.c.0.s8 %v273
    %v275 = vperm.slane %v267, %v274
    %v276 = vrot.slane %v271, 4
    %v277 = vsel %vm152, %v276, %v261
    %v278 = vrot.slane %v261, 4
    %v279 = vsel %vm152, %v271, %v278
    %v281 = vunpack.c.l.s4 1934713408
    %v282 = vunpack.c.0.s8 %v281
    %v283 = vperm.slane %v277, %v282
    %v285 = vunpack.c.l.s4 1934713408
    %v286 = vunpack.c.0.s8 %v285
    %v287 = vperm.slane %v279, %v286
    %v288 = vrot.slane %v275, 4
    %v289 = vsel %vm152, %v288, %v265
    %v290 = vrot.slane %v265, 4
    %v291 = vsel %vm152, %v275, %v290
    %v293 = vunpack.c.l.s4 1934713408
    %v294 = vunpack.c.0.s8 %v293
    %v295 = vperm.slane %v289, %v294
    %v297 = vunpack.c.l.s4 1934713408
    %v298 = vunpack.c.0.s8 %v297
    %v299 = vperm.slane %v291, %v298
    %v300 = vrot.slane %v283, 4
    %v301 = vsel %vm152, 0.0, %v300
    %v302 = vrot.slane %v287, 4
    %v303 = vsel %vm152, 0.0, %v302
    %v304 = vrot.slane %v295, 4
    %v305 = vsel %vm152, 0.0, %v304
    %v306 = vrot.slane %v299, 4
    %v307 = vsel %vm152, 0.0, %v306
    %v309 = vperm.slane %v52, 0
    %v310 = vperm.slane %v52, 1
    %v311 = vperm.slane %v52, 2
    %vm315 = vcmask 261120
    %v317 = vsel %vm315, 0.0, 0
    %319 = vmatpush.msra.mxu0 0.0
    %320 = vmatpush.msra.mxu0 0.0
    %321 = vmatpush.msra.mxu0 0.0
    %322 = vmatpush.msra.mxu0 0.0
    %323 = vmatpush.msra.mxu0 0.0
    %324 = vmatpush.msra.mxu0 0.0
    %325 = vmatpush.msra.mxu0 0.0
    %326 = vmatpush.msra.mxu0 0.0
    %327 = vmatpush.msra.mxu0 0.0
    %328 = vmatpush.msra.mxu0 0.0
    %329 = vmatpush.msra.mxu0 0.0
    %330 = vmatpush.msra.mxu0 0.0
    %331 = vmatpush.msra.mxu0 %v43
    %332 = vmatpush.msra.mxu0 %v40
    %333 = vmatpush.msra.mxu0 %v37
    %334 = vmatpush.msra.mxu0 %v34
    %335 = vmatmul.f32.gmra.mxu0 %v317
    %v336 = vpop.f32.mrf.mxu0
    %v337 = vadd.f32 %v309, %v336
    %338 = vdwg.mxu0
    %339 = vmatpush.msra.mxu0 0.0
    %340 = vmatpush.msra.mxu0 0.0
    %341 = vmatpush.msra.mxu0 0.0
    %342 = vmatpush.msra.mxu0 0.0
    %343 = vmatpush.msra.mxu0 0.0
    %344 = vmatpush.msra.mxu0 0.0
    %345 = vmatpush.msra.mxu0 0.0
    %346 = vmatpush.msra.mxu0 0.0
    %347 = vmatpush.msra.mxu0 0.0
    %348 = vmatpush.msra.mxu0 0.0
    %349 = vmatpush.msra.mxu0 0.0
    %350 = vmatpush.msra.mxu0 0.0
    %351 = vmatpush.msra.mxu0 %v44
    %352 = vmatpush.msra.mxu0 %v41
    %353 = vmatpush.msra.mxu0 %v38
    %354 = vmatpush.msra.mxu0 %v35
    %355 = vmatmul.f32.gmra.mxu0 %v317
    %v356 = vpop.f32.mrf.mxu0
    %v357 = vadd.f32 %v310, %v356
    %358 = vdwg.mxu0
    %359 = vmatpush.msra.mxu0 0.0
    %360 = vmatpush.msra.mxu0 0.0
    %361 = vmatpush.msra.mxu0 0.0
    %362 = vmatpush.msra.mxu0 0.0
    %363 = vmatpush.msra.mxu0 0.0
    %364 = vmatpush.msra.mxu0 0.0
    %365 = vmatpush.msra.mxu0 0.0
    %366 = vmatpush.msra.mxu0 0.0
    %367 = vmatpush.msra.mxu0 0.0
    %368 = vmatpush.msra.mxu0 0.0
    %369 = vmatpush.msra.mxu0 0.0
    %370 = vmatpush.msra.mxu0 0.0
    %371 = vmatpush.msra.mxu0 %v45
    %372 = vmatpush.msra.mxu0 %v42
    %373 = vmatpush.msra.mxu0 %v39
    %374 = vmatpush.msra.mxu0 %v36
    %375 = vmatmul.f32.gmra.mxu0 %v317
    %v376 = vpop.f32.mrf.mxu0
    %v377 = vadd.f32 %v311, %v376
    %378 = vdwg.mxu0
    %v379 = vadd.f32 %v179, %v337
    %v380 = vxor.u32 %v379, 2147483648
    %v381 = vmul.f32 %v380, 1.442695
    %v382 = vpow.pop %v381
    %v383 = vadd.f32 %v382, 1.0
    %v384 = vrcp.pop %v383
    %v385 = vmul.f32 %v383, %v384
    %v386 = vsub.f32 1.0, %v385
    %v387 = vmul.f32 %v384, %v386
    %v388 = vadd.f32 %v384, %v387
    %vm389 = vweird.f32 %v383
    %vm390 = vweird.f32 %v384
    %vm391 = vmor %vm389, %vm390
    %v392 = vsel %vm391, %v384, %v388
    %v393 = vand.u32 2147483647, %v383
    %vm394 = vcmp.eq.f32.partialorder %v393, 8.507059e+37
    %v395 = vand.u32 %v383, 2147483648
    %v396 = vor.u32 1.1754944e-38, %v395
    %v397 = vsel %vm394, %v396, %v392
    %v398 = vmul.f32 1.0, %v397
    %v399 = vadd.f32 %v231, %v357
    %v400 = vxor.u32 %v399, 2147483648
    %v401 = vmul.f32 %v400, 1.442695
    %v402 = vpow.pop %v401
    %v403 = vadd.f32 %v402, 1.0
    %v404 = vrcp.pop %v403
    %v405 = vmul.f32 %v403, %v404
    %v406 = vsub.f32 1.0, %v405
    %v407 = vmul.f32 %v404, %v406
    %v408 = vadd.f32 %v404, %v407
    %vm409 = vweird.f32 %v403
    %vm410 = vweird.f32 %v404
    %vm411 = vmor %vm409, %vm410
    %v412 = vsel %vm411, %v404, %v408
    %v413 = vand.u32 2147483647, %v403
    %vm414 = vcmp.eq.f32.partialorder %v413, 8.507059e+37
    %v415 = vand.u32 %v403, 2147483648
    %v416 = vor.u32 1.1754944e-38, %v415
    %v417 = vsel %vm414, %v416, %v412
    %v418 = vmul.f32 1.0, %v417
    %v419 = vmul.f32 %v398, %v377
    %v420 = vadd.f32 %v283, %v419
    %v421 = vtanh.pop %v420
    %v422 = vsub.f32 1.0, %v418
    %v423 = vmul.f32 %v422, %v421
    %v424 = vmul.f32 %v418, 0.0
    %v425 = vadd.f32 %v423, %v424
    %v427 = vsel %vm315, %v425, 0
    %429 = vmatpush.msra.mxu0 0.0
    %430 = vmatpush.msra.mxu0 0.0
    %431 = vmatpush.msra.mxu0 0.0
    %432 = vmatpush.msra.mxu0 0.0
    %433 = vmatpush.msra.mxu0 0.0
    %434 = vmatpush.msra.mxu0 0.0
    %435 = vmatpush.msra.mxu0 0.0
    %436 = vmatpush.msra.mxu0 0.0
    %437 = vmatpush.msra.mxu0 0.0
    %438 = vmatpush.msra.mxu0 0.0
    %439 = vmatpush.msra.mxu0 0.0
    %440 = vmatpush.msra.mxu0 0.0
    %441 = vmatpush.msra.mxu0 %v43
    %442 = vmatpush.msra.mxu0 %v40
    %443 = vmatpush.msra.mxu0 %v37
    %444 = vmatpush.msra.mxu0 %v34
    %445 = vmatmul.f32.gmra.mxu0 %v427
    %v446 = vpop.f32.mrf.mxu0
    %v447 = vadd.f32 %v309, %v446
    %448 = vdwg.mxu0
    %449 = vmatpush.msra.mxu0 0.0
    %450 = vmatpush.msra.mxu0 0.0
    %451 = vmatpush.msra.mxu0 0.0
    %452 = vmatpush.msra.mxu0 0.0
    %453 = vmatpush.msra.mxu0 0.0
    %454 = vmatpush.msra.mxu0 0.0
    %455 = vmatpush.msra.mxu0 0.0
    %456 = vmatpush.msra.mxu0 0.0
    %457 = vmatpush.msra.mxu0 0.0
    %458 = vmatpush.msra.mxu0 0.0
    %459 = vmatpush.msra.mxu0 0.0
    %460 = vmatpush.msra.mxu0 0.0
    %461 = vmatpush.msra.mxu0 %v44
    %462 = vmatpush.msra.mxu0 %v41
    %463 = vmatpush.msra.mxu0 %v38
    %464 = vmatpush.msra.mxu0 %v35
    %465 = vmatmul.f32.gmra.mxu0 %v427
    %v466 = vpop.f32.mrf.mxu0
    %v467 = vadd.f32 %v310, %v466
    %468 = vdwg.mxu0
    %469 = vmatpush.msra.mxu0 0.0
    %470 = vmatpush.msra.mxu0 0.0
    %471 = vmatpush.msra.mxu0 0.0
    %472 = vmatpush.msra.mxu0 0.0
    %473 = vmatpush.msra.mxu0 0.0
    %474 = vmatpush.msra.mxu0 0.0
    %475 = vmatpush.msra.mxu0 0.0
    %476 = vmatpush.msra.mxu0 0.0
    %477 = vmatpush.msra.mxu0 0.0
    %478 = vmatpush.msra.mxu0 0.0
    %479 = vmatpush.msra.mxu0 0.0
    %480 = vmatpush.msra.mxu0 0.0
    %481 = vmatpush.msra.mxu0 %v45
    %482 = vmatpush.msra.mxu0 %v42
    %483 = vmatpush.msra.mxu0 %v39
    %484 = vmatpush.msra.mxu0 %v36
    %485 = vmatmul.f32.gmra.mxu0 %v427
    %v486 = vpop.f32.mrf.mxu0
    %v487 = vadd.f32 %v311, %v486
    %488 = vdwg.mxu0
    %v489 = vadd.f32 %v197, %v447
    %v490 = vxor.u32 %v489, 2147483648
    %v491 = vmul.f32 %v490, 1.442695
    %v492 = vpow.pop %v491
    %v493 = vadd.f32 %v492, 1.0
    %v494 = vrcp.pop %v493
    %v495 = vmul.f32 %v493, %v494
    %v496 = vsub.f32 1.0, %v495
    %v497 = vmul.f32 %v494, %v496
    %v498 = vadd.f32 %v494, %v497
    %vm499 = vweird.f32 %v493
    %vm500 = vweird.f32 %v494
    %vm501 = vmor %vm499, %vm500
    %v502 = vsel %vm501, %v494, %v498
    %v503 = vand.u32 2147483647, %v493
    %vm504 = vcmp.eq.f32.partialorder %v503, 8.507059e+37
    %v505 = vand.u32 %v493, 2147483648
    %v506 = vor.u32 1.1754944e-38, %v505
    %v507 = vsel %vm504, %v506, %v502
    %v508 = vmul.f32 1.0, %v507
    %v509 = vadd.f32 %v249, %v467
    %v510 = vxor.u32 %v509, 2147483648
    %v511 = vmul.f32 %v510, 1.442695
    %v512 = vpow.pop %v511
    %v513 = vadd.f32 %v512, 1.0
    %v514 = vrcp.pop %v513
    %v515 = vmul.f32 %v513, %v514
    %v516 = vsub.f32 1.0, %v515
    %v517 = vmul.f32 %v514, %v516
    %v518 = vadd.f32 %v514, %v517
    %vm519 = vweird.f32 %v513
    %vm520 = vweird.f32 %v514
    %vm521 = vmor %vm519, %vm520
    %v522 = vsel %vm521, %v514, %v518
    %v523 = vand.u32 2147483647, %v513
    %vm524 = vcmp.eq.f32.partialorder %v523, 8.507059e+37
    %v525 = vand.u32 %v513, 2147483648
    %v526 = vor.u32 1.1754944e-38, %v525
    %v527 = vsel %vm524, %v526, %v522
    %v528 = vmul.f32 1.0, %v527
    %v529 = vmul.f32 %v508, %v487
    %v530 = vadd.f32 %v301, %v529
    %v531 = vtanh.pop %v530
    %v532 = vsub.f32 1.0, %v528
    %v533 = vmul.f32 %v532, %v531
    %v534 = vmul.f32 %v528, %v425
    %v535 = vadd.f32 %v533, %v534
    %v537 = vsel %vm315, %v535, 0
    %539 = vmatpush.msra.mxu0 0.0
    %540 = vmatpush.msra.mxu0 0.0
    %541 = vmatpush.msra.mxu0 0.0
    %542 = vmatpush.msra.mxu0 0.0
    %543 = vmatpush.msra.mxu0 0.0
    %544 = vmatpush.msra.mxu0 0.0
    %545 = vmatpush.msra.mxu0 0.0
    %546 = vmatpush.msra.mxu0 0.0
    %547 = vmatpush.msra.mxu0 0.0
    %548 = vmatpush.msra.mxu0 0.0
    %549 = vmatpush.msra.mxu0 0.0
    %550 = vmatpush.msra.mxu0 0.0
    %551 = vmatpush.msra.mxu0 %v43
    %552 = vmatpush.msra.mxu0 %v40
    %553 = vmatpush.msra.mxu0 %v37
    %554 = vmatpush.msra.mxu0 %v34
    %555 = vmatmul.f32.gmra.mxu0 %v537
    %v556 = vpop.f32.mrf.mxu0
    %v557 = vadd.f32 %v309, %v556
    %558 = vdwg.mxu0
    %559 = vmatpush.msra.mxu0 0.0
    %560 = vmatpush.msra.mxu0 0.0
    %561 = vmatpush.msra.mxu0 0.0
    %562 = vmatpush.msra.mxu0 0.0
    %563 = vmatpush.msra.mxu0 0.0
    %564 = vmatpush.msra.mxu0 0.0
    %565 = vmatpush.msra.mxu0 0.0
    %566 = vmatpush.msra.mxu0 0.0
    %567 = vmatpush.msra.mxu0 0.0
    %568 = vmatpush.msra.mxu0 0.0
    %569 = vmatpush.msra.mxu0 0.0
    %570 = vmatpush.msra.mxu0 0.0
    %571 = vmatpush.msra.mxu0 %v44
    %572 = vmatpush.msra.mxu0 %v41
    %573 = vmatpush.msra.mxu0 %v38
    %574 = vmatpush.msra.mxu0 %v35
    %575 = vmatmul.f32.gmra.mxu0 %v537
    %v576 = vpop.f32.mrf.mxu0
    %v577 = vadd.f32 %v310, %v576
    %578 = vdwg.mxu0
    %579 = vmatpush.msra.mxu0 0.0
    %580 = vmatpush.msra.mxu0 0.0
    %581 = vmatpush.msra.mxu0 0.0
    %582 = vmatpush.msra.mxu0 0.0
    %583 = vmatpush.msra.mxu0 0.0
    %584 = vmatpush.msra.mxu0 0.0
    %585 = vmatpush.msra.mxu0 0.0
    %586 = vmatpush.msra.mxu0 0.0
    %587 = vmatpush.msra.mxu0 0.0
    %588 = vmatpush.msra.mxu0 0.0
    %589 = vmatpush.msra.mxu0 0.0
    %590 = vmatpush.msra.mxu0 0.0
    %591 = vmatpush.msra.mxu0 %v45
    %592 = vmatpush.msra.mxu0 %v42
    %593 = vmatpush.msra.mxu0 %v39
    %594 = vmatpush.msra.mxu0 %v36
    %595 = vmatmul.f32.gmra.mxu0 %v537
    %v596 = vpop.f32.mrf.mxu0
    %v597 = vadd.f32 %v311, %v596
    %598 = vdwg.mxu0
    %v599 = vadd.f32 %v183, %v557
    %v600 = vxor.u32 %v599, 2147483648
    %v601 = vmul.f32 %v600, 1.442695
    %v602 = vpow.pop %v601
    %v603 = vadd.f32 %v602, 1.0
    %v604 = vrcp.pop %v603
    %v605 = vmul.f32 %v603, %v604
    %v606 = vsub.f32 1.0, %v605
    %v607 = vmul.f32 %v604, %v606
    %v608 = vadd.f32 %v604, %v607
    %vm609 = vweird.f32 %v603
    %vm610 = vweird.f32 %v604
    %vm611 = vmor %vm609, %vm610
    %v612 = vsel %vm611, %v604, %v608
    %v613 = vand.u32 2147483647, %v603
    %vm614 = vcmp.eq.f32.partialorder %v613, 8.507059e+37
    %v615 = vand.u32 %v603, 2147483648
    %v616 = vor.u32 1.1754944e-38, %v615
    %v617 = vsel %vm614, %v616, %v612
    %v618 = vmul.f32 1.0, %v617
    %v619 = vadd.f32 %v235, %v577
    %v620 = vxor.u32 %v619, 2147483648
    %v621 = vmul.f32 %v620, 1.442695
    %v622 = vpow.pop %v621
    %v623 = vadd.f32 %v622, 1.0
    %v624 = vrcp.pop %v623
    %v625 = vmul.f32 %v623, %v624
    %v626 = vsub.f32 1.0, %v625
    %v627 = vmul.f32 %v624, %v626
    %v628 = vadd.f32 %v624, %v627
    %vm629 = vweird.f32 %v623
    %vm630 = vweird.f32 %v624
    %vm631 = vmor %vm629, %vm630
    %v632 = vsel %vm631, %v624, %v628
    %v633 = vand.u32 2147483647, %v623
    %vm634 = vcmp.eq.f32.partialorder %v633, 8.507059e+37
    %v635 = vand.u32 %v623, 2147483648
    %v636 = vor.u32 1.1754944e-38, %v635
    %v637 = vsel %vm634, %v636, %v632
    %v638 = vmul.f32 1.0, %v637
    %v639 = vmul.f32 %v618, %v597
    %v640 = vadd.f32 %v287, %v639
    %v641 = vtanh.pop %v640
    %v642 = vsub.f32 1.0, %v638
    %v643 = vmul.f32 %v642, %v641
    %v644 = vmul.f32 %v638, %v535
    %v645 = vadd.f32 %v643, %v644
    %v647 = vsel %vm315, %v645, 0
    %649 = vmatpush.msra.mxu0 0.0
    %650 = vmatpush.msra.mxu0 0.0
    %651 = vmatpush.msra.mxu0 0.0
    %652 = vmatpush.msra.mxu0 0.0
    %653 = vmatpush.msra.mxu0 0.0
    %654 = vmatpush.msra.mxu0 0.0
    %655 = vmatpush.msra.mxu0 0.0
    %656 = vmatpush.msra.mxu0 0.0
    %657 = vmatpush.msra.mxu0 0.0
    %658 = vmatpush.msra.mxu0 0.0
    %659 = vmatpush.msra.mxu0 0.0
    %660 = vmatpush.msra.mxu0 0.0
    %661 = vmatpush.msra.mxu0 %v43
    %662 = vmatpush.msra.mxu0 %v40
    %663 = vmatpush.msra.mxu0 %v37
    %664 = vmatpush.msra.mxu0 %v34
    %665 = vmatmul.f32.gmra.mxu0 %v647
    %v666 = vpop.f32.mrf.mxu0
    %v667 = vadd.f32 %v309, %v666
    %668 = vdwg.mxu0
    %669 = vmatpush.msra.mxu0 0.0
    %670 = vmatpush.msra.mxu0 0.0
    %671 = vmatpush.msra.mxu0 0.0
    %672 = vmatpush.msra.mxu0 0.0
    %673 = vmatpush.msra.mxu0 0.0
    %674 = vmatpush.msra.mxu0 0.0
    %675 = vmatpush.msra.mxu0 0.0
    %676 = vmatpush.msra.mxu0 0.0
    %677 = vmatpush.msra.mxu0 0.0
    %678 = vmatpush.msra.mxu0 0.0
    %679 = vmatpush.msra.mxu0 0.0
    %680 = vmatpush.msra.mxu0 0.0
    %681 = vmatpush.msra.mxu0 %v44
    %682 = vmatpush.msra.mxu0 %v41
    %683 = vmatpush.msra.mxu0 %v38
    %684 = vmatpush.msra.mxu0 %v35
    %685 = vmatmul.f32.gmra.mxu0 %v647
    %v686 = vpop.f32.mrf.mxu0
    %v687 = vadd.f32 %v310, %v686
    %688 = vdwg.mxu0
    %689 = vmatpush.msra.mxu0 0.0
    %690 = vmatpush.msra.mxu0 0.0
    %691 = vmatpush.msra.mxu0 0.0
    %692 = vmatpush.msra.mxu0 0.0
    %693 = vmatpush.msra.mxu0 0.0
    %694 = vmatpush.msra.mxu0 0.0
    %695 = vmatpush.msra.mxu0 0.0
    %696 = vmatpush.msra.mxu0 0.0
    %697 = vmatpush.msra.mxu0 0.0
    %698 = vmatpush.msra.mxu0 0.0
    %699 = vmatpush.msra.mxu0 0.0
    %700 = vmatpush.msra.mxu0 0.0
    %701 = vmatpush.msra.mxu0 %v45
    %702 = vmatpush.msra.mxu0 %v42
    %703 = vmatpush.msra.mxu0 %v39
    %704 = vmatpush.msra.mxu0 %v36
    %705 = vmatmul.f32.gmra.mxu0 %v647
    %v706 = vpop.f32.mrf.mxu0
    %v707 = vadd.f32 %v311, %v706
    %708 = vdwg.mxu0
    %v709 = vadd.f32 %v199, %v667
    %v710 = vxor.u32 %v709, 2147483648
    %v711 = vmul.f32 %v710, 1.442695
    %v712 = vpow.pop %v711
    %v713 = vadd.f32 %v712, 1.0
    %v714 = vrcp.pop %v713
    %v715 = vmul.f32 %v713, %v714
    %v716 = vsub.f32 1.0, %v715
    %v717 = vmul.f32 %v714, %v716
    %v718 = vadd.f32 %v714, %v717
    %vm719 = vweird.f32 %v713
    %vm720 = vweird.f32 %v714
    %vm721 = vmor %vm719, %vm720
    %v722 = vsel %vm721, %v714, %v718
    %v723 = vand.u32 2147483647, %v713
    %vm724 = vcmp.eq.f32.partialorder %v723, 8.507059e+37
    %v725 = vand.u32 %v713, 2147483648
    %v726 = vor.u32 1.1754944e-38, %v725
    %v727 = vsel %vm724, %v726, %v722
    %v728 = vmul.f32 1.0, %v727
    %v729 = vadd.f32 %v251, %v687
    %v730 = vxor.u32 %v729, 2147483648
    %v731 = vmul.f32 %v730, 1.442695
    %v732 = vpow.pop %v731
    %v733 = vadd.f32 %v732, 1.0
    %v734 = vrcp.pop %v733
    %v735 = vmul.f32 %v733, %v734
    %v736 = vsub.f32 1.0, %v735
    %v737 = vmul.f32 %v734, %v736
    %v738 = vadd.f32 %v734, %v737
    %vm739 = vweird.f32 %v733
    %vm740 = vweird.f32 %v734
    %vm741 = vmor %vm739, %vm740
    %v742 = vsel %vm741, %v734, %v738
    %v743 = vand.u32 2147483647, %v733
    %vm744 = vcmp.eq.f32.partialorder %v743, 8.507059e+37
    %v745 = vand.u32 %v733, 2147483648
    %v746 = vor.u32 1.1754944e-38, %v745
    %v747 = vsel %vm744, %v746, %v742
    %v748 = vmul.f32 1.0, %v747
    %v749 = vmul.f32 %v728, %v707
    %v750 = vadd.f32 %v303, %v749
    %v751 = vtanh.pop %v750
    %v752 = vsub.f32 1.0, %v748
    %v753 = vmul.f32 %v752, %v751
    %v754 = vmul.f32 %v748, %v645
    %v755 = vadd.f32 %v753, %v754
    %v757 = vsel %vm315, %v755, 0
    %759 = vmatpush.msra.mxu0 0.0
    %760 = vmatpush.msra.mxu0 0.0
    %761 = vmatpush.msra.mxu0 0.0
    %762 = vmatpush.msra.mxu0 0.0
    %763 = vmatpush.msra.mxu0 0.0
    %764 = vmatpush.msra.mxu0 0.0
    %765 = vmatpush.msra.mxu0 0.0
    %766 = vmatpush.msra.mxu0 0.0
    %767 = vmatpush.msra.mxu0 0.0
    %768 = vmatpush.msra.mxu0 0.0
    %769 = vmatpush.msra.mxu0 0.0
    %770 = vmatpush.msra.mxu0 0.0
    %771 = vmatpush.msra.mxu0 %v43
    %772 = vmatpush.msra.mxu0 %v40
    %773 = vmatpush.msra.mxu0 %v37
    %774 = vmatpush.msra.mxu0 %v34
    %775 = vmatmul.f32.gmra.mxu0 %v757
    %v776 = vpop.f32.mrf.mxu0
    %v777 = vadd.f32 %v309, %v776
    %778 = vdwg.mxu0
    %779 = vmatpush.msra.mxu0 0.0
    %780 = vmatpush.msra.mxu0 0.0
    %781 = vmatpush.msra.mxu0 0.0
    %782 = vmatpush.msra.mxu0 0.0
    %783 = vmatpush.msra.mxu0 0.0
    %784 = vmatpush.msra.mxu0 0.0
    %785 = vmatpush.msra.mxu0 0.0
    %786 = vmatpush.msra.mxu0 0.0
    %787 = vmatpush.msra.mxu0 0.0
    %788 = vmatpush.msra.mxu0 0.0
    %789 = vmatpush.msra.mxu0 0.0
    %790 = vmatpush.msra.mxu0 0.0
    %791 = vmatpush.msra.mxu0 %v44
    %792 = vmatpush.msra.mxu0 %v41
    %793 = vmatpush.msra.mxu0 %v38
    %794 = vmatpush.msra.mxu0 %v35
    %795 = vmatmul.f32.gmra.mxu0 %v757
    %v796 = vpop.f32.mrf.mxu0
    %v797 = vadd.f32 %v310, %v796
    %798 = vdwg.mxu0
    %799 = vmatpush.msra.mxu0 0.0
    %800 = vmatpush.msra.mxu0 0.0
    %801 = vmatpush.msra.mxu0 0.0
    %802 = vmatpush.msra.mxu0 0.0
    %803 = vmatpush.msra.mxu0 0.0
    %804 = vmatpush.msra.mxu0 0.0
    %805 = vmatpush.msra.mxu0 0.0
    %806 = vmatpush.msra.mxu0 0.0
    %807 = vmatpush.msra.mxu0 0.0
    %808 = vmatpush.msra.mxu0 0.0
    %809 = vmatpush.msra.mxu0 0.0
    %810 = vmatpush.msra.mxu0 0.0
    %811 = vmatpush.msra.mxu0 %v45
    %812 = vmatpush.msra.mxu0 %v42
    %813 = vmatpush.msra.mxu0 %v39
    %814 = vmatpush.msra.mxu0 %v36
    %815 = vmatmul.f32.gmra.mxu0 %v757
    %v816 = vpop.f32.mrf.mxu0
    %v817 = vadd.f32 %v311, %v816
    %818 = vdwg.mxu0
    %v819 = vadd.f32 %v191, %v777
    %v820 = vxor.u32 %v819, 2147483648
    %v821 = vmul.f32 %v820, 1.442695
    %v822 = vpow.pop %v821
    %v823 = vadd.f32 %v822, 1.0
    %v824 = vrcp.pop %v823
    %v825 = vmul.f32 %v823, %v824
    %v826 = vsub.f32 1.0, %v825
    %v827 = vmul.f32 %v824, %v826
    %v828 = vadd.f32 %v824, %v827
    %vm829 = vweird.f32 %v823
    %vm830 = vweird.f32 %v824
    %vm831 = vmor %vm829, %vm830
    %v832 = vsel %vm831, %v824, %v828
    %v833 = vand.u32 2147483647, %v823
    %vm834 = vcmp.eq.f32.partialorder %v833, 8.507059e+37
    %v835 = vand.u32 %v823, 2147483648
    %v836 = vor.u32 1.1754944e-38, %v835
    %v837 = vsel %vm834, %v836, %v832
    %v838 = vmul.f32 1.0, %v837
    %v839 = vadd.f32 %v243, %v797
    %v840 = vxor.u32 %v839, 2147483648
    %v841 = vmul.f32 %v840, 1.442695
    %v842 = vpow.pop %v841
    %v843 = vadd.f32 %v842, 1.0
    %v844 = vrcp.pop %v843
    %v845 = vmul.f32 %v843, %v844
    %v846 = vsub.f32 1.0, %v845
    %v847 = vmul.f32 %v844, %v846
    %v848 = vadd.f32 %v844, %v847
    %vm849 = vweird.f32 %v843
    %vm850 = vweird.f32 %v844
    %vm851 = vmor %vm849, %vm850
    %v852 = vsel %vm851, %v844, %v848
    %v853 = vand.u32 2147483647, %v843
    %vm854 = vcmp.eq.f32.partialorder %v853, 8.507059e+37
    %v855 = vand.u32 %v843, 2147483648
    %v856 = vor.u32 1.1754944e-38, %v855
    %v857 = vsel %vm854, %v856, %v852
    %v858 = vmul.f32 1.0, %v857
    %v859 = vmul.f32 %v838, %v817
    %v860 = vadd.f32 %v295, %v859
    %v861 = vtanh.pop %v860
    %v862 = vsub.f32 1.0, %v858
    %v863 = vmul.f32 %v862, %v861
    %v864 = vmul.f32 %v858, %v755
    %v865 = vadd.f32 %v863, %v864
    %v867 = vsel %vm315, %v865, 0
    %869 = vmatpush.msra.mxu0 0.0
    %870 = vmatpush.msra.mxu0 0.0
    %871 = vmatpush.msra.mxu0 0.0
    %872 = vmatpush.msra.mxu0 0.0
    %873 = vmatpush.msra.mxu0 0.0
    %874 = vmatpush.msra.mxu0 0.0
    %875 = vmatpush.msra.mxu0 0.0
    %876 = vmatpush.msra.mxu0 0.0
    %877 = vmatpush.msra.mxu0 0.0
    %878 = vmatpush.msra.mxu0 0.0
    %879 = vmatpush.msra.mxu0 0.0
    %880 = vmatpush.msra.mxu0 0.0
    %881 = vmatpush.msra.mxu0 %v43
    %882 = vmatpush.msra.mxu0 %v40
    %883 = vmatpush.msra.mxu0 %v37
    %884 = vmatpush.msra.mxu0 %v34
    %885 = vmatmul.f32.gmra.mxu0 %v867
    %v886 = vpop.f32.mrf.mxu0
    %v887 = vadd.f32 %v309, %v886
    %888 = vdwg.mxu0
    %889 = vmatpush.msra.mxu0 0.0
    %890 = vmatpush.msra.mxu0 0.0
    %891 = vmatpush.msra.mxu0 0.0
    %892 = vmatpush.msra.mxu0 0.0
    %893 = vmatpush.msra.mxu0 0.0
    %894 = vmatpush.msra.mxu0 0.0
    %895 = vmatpush.msra.mxu0 0.0
    %896 = vmatpush.msra.mxu0 0.0
    %897 = vmatpush.msra.mxu0 0.0
    %898 = vmatpush.msra.mxu0 0.0
    %899 = vmatpush.msra.mxu0 0.0
    %900 = vmatpush.msra.mxu0 0.0
    %901 = vmatpush.msra.mxu0 %v44
    %902 = vmatpush.msra.mxu0 %v41
    %903 = vmatpush.msra.mxu0 %v38
    %904 = vmatpush.msra.mxu0 %v35
    %905 = vmatmul.f32.gmra.mxu0 %v867
    %v906 = vpop.f32.mrf.mxu0
    %v907 = vadd.f32 %v310, %v906
    %908 = vdwg.mxu0
    %909 = vmatpush.msra.mxu0 0.0
    %910 = vmatpush.msra.mxu0 0.0
    %911 = vmatpush.msra.mxu0 0.0
    %912 = vmatpush.msra.mxu0 0.0
    %913 = vmatpush.msra.mxu0 0.0
    %914 = vmatpush.msra.mxu0 0.0
    %915 = vmatpush.msra.mxu0 0.0
    %916 = vmatpush.msra.mxu0 0.0
    %917 = vmatpush.msra.mxu0 0.0
    %918 = vmatpush.msra.mxu0 0.0
    %919 = vmatpush.msra.mxu0 0.0
    %920 = vmatpush.msra.mxu0 0.0
    %921 = vmatpush.msra.mxu0 %v45
    %922 = vmatpush.msra.mxu0 %v42
    %923 = vmatpush.msra.mxu0 %v39
    %924 = vmatpush.msra.mxu0 %v36
    %925 = vmatmul.f32.gmra.mxu0 %v867
    %v926 = vpop.f32.mrf.mxu0
    %v927 = vadd.f32 %v311, %v926
    %928 = vdwg.mxu0
    %v929 = vadd.f32 %v201, %v887
    %v930 = vxor.u32 %v929, 2147483648
    %v931 = vmul.f32 %v930, 1.442695
    %v932 = vpow.pop %v931
    %v933 = vadd.f32 %v932, 1.0
    %v934 = vrcp.pop %v933
    %v935 = vmul.f32 %v933, %v934
    %v936 = vsub.f32 1.0, %v935
    %v937 = vmul.f32 %v934, %v936
    %v938 = vadd.f32 %v934, %v937
    %vm939 = vweird.f32 %v933
    %vm940 = vweird.f32 %v934
    %vm941 = vmor %vm939, %vm940
    %v942 = vsel %vm941, %v934, %v938
    %v943 = vand.u32 2147483647, %v933
    %vm944 = vcmp.eq.f32.partialorder %v943, 8.507059e+37
    %v945 = vand.u32 %v933, 2147483648
    %v946 = vor.u32 1.1754944e-38, %v945
    %v947 = vsel %vm944, %v946, %v942
    %v948 = vmul.f32 1.0, %v947
    %v949 = vadd.f32 %v253, %v907
    %v950 = vxor.u32 %v949, 2147483648
    %v951 = vmul.f32 %v950, 1.442695
    %v952 = vpow.pop %v951
    %v953 = vadd.f32 %v952, 1.0
    %v954 = vrcp.pop %v953
    %v955 = vmul.f32 %v953, %v954
    %v956 = vsub.f32 1.0, %v955
    %v957 = vmul.f32 %v954, %v956
    %v958 = vadd.f32 %v954, %v957
    %vm959 = vweird.f32 %v953
    %vm960 = vweird.f32 %v954
    %vm961 = vmor %vm959, %vm960
    %v962 = vsel %vm961, %v954, %v958
    %v963 = vand.u32 2147483647, %v953
    %vm964 = vcmp.eq.f32.partialorder %v963, 8.507059e+37
    %v965 = vand.u32 %v953, 2147483648
    %v966 = vor.u32 1.1754944e-38, %v965
    %v967 = vsel %vm964, %v966, %v962
    %v968 = vmul.f32 1.0, %v967
    %v969 = vmul.f32 %v948, %v927
    %v970 = vadd.f32 %v305, %v969
    %v971 = vtanh.pop %v970
    %v972 = vsub.f32 1.0, %v968
    %v973 = vmul.f32 %v972, %v971
    %v974 = vmul.f32 %v968, %v865
    %v975 = vadd.f32 %v973, %v974
    %v977 = vsel %vm315, %v975, 0
    %979 = vmatpush.msra.mxu0 0.0
    %980 = vmatpush.msra.mxu0 0.0
    %981 = vmatpush.msra.mxu0 0.0
    %982 = vmatpush.msra.mxu0 0.0
    %983 = vmatpush.msra.mxu0 0.0
    %984 = vmatpush.msra.mxu0 0.0
    %985 = vmatpush.msra.mxu0 0.0
    %986 = vmatpush.msra.mxu0 0.0
    %987 = vmatpush.msra.mxu0 0.0
    %988 = vmatpush.msra.mxu0 0.0
    %989 = vmatpush.msra.mxu0 0.0
    %990 = vmatpush.msra.mxu0 0.0
    %991 = vmatpush.msra.mxu0 %v43
    %992 = vmatpush.msra.mxu0 %v40
    %993 = vmatpush.msra.mxu0 %v37
    %994 = vmatpush.msra.mxu0 %v34
    %995 = vmatmul.f32.gmra.mxu0 %v977
    %v996 = vpop.f32.mrf.mxu0
    %v997 = vadd.f32 %v309, %v996
    %998 = vdwg.mxu0
    %999 = vmatpush.msra.mxu0 0.0
    %1000 = vmatpush.msra.mxu0 0.0
    %1001 = vmatpush.msra.mxu0 0.0
    %1002 = vmatpush.msra.mxu0 0.0
    %1003 = vmatpush.msra.mxu0 0.0
    %1004 = vmatpush.msra.mxu0 0.0
    %1005 = vmatpush.msra.mxu0 0.0
    %1006 = vmatpush.msra.mxu0 0.0
    %1007 = vmatpush.msra.mxu0 0.0
    %1008 = vmatpush.msra.mxu0 0.0
    %1009 = vmatpush.msra.mxu0 0.0
    %1010 = vmatpush.msra.mxu0 0.0
    %1011 = vmatpush.msra.mxu0 %v44
    %1012 = vmatpush.msra.mxu0 %v41
    %1013 = vmatpush.msra.mxu0 %v38
    %1014 = vmatpush.msra.mxu0 %v35
    %1015 = vmatmul.f32.gmra.mxu0 %v977
    %v1016 = vpop.f32.mrf.mxu0
    %v1017 = vadd.f32 %v310, %v1016
    %1018 = vdwg.mxu0
    %1019 = vmatpush.msra.mxu0 0.0
    %1020 = vmatpush.msra.mxu0 0.0
    %1021 = vmatpush.msra.mxu0 0.0
    %1022 = vmatpush.msra.mxu0 0.0
    %1023 = vmatpush.msra.mxu0 0.0
    %1024 = vmatpush.msra.mxu0 0.0
    %1025 = vmatpush.msra.mxu0 0.0
    %1026 = vmatpush.msra.mxu0 0.0
    %1027 = vmatpush.msra.mxu0 0.0
    %1028 = vmatpush.msra.mxu0 0.0
    %1029 = vmatpush.msra.mxu0 0.0
    %1030 = vmatpush.msra.mxu0 0.0
    %1031 = vmatpush.msra.mxu0 %v45
    %1032 = vmatpush.msra.mxu0 %v42
    %1033 = vmatpush.msra.mxu0 %v39
    %1034 = vmatpush.msra.mxu0 %v36
    %1035 = vmatmul.f32.gmra.mxu0 %v977
    %v1036 = vpop.f32.mrf.mxu0
    %v1037 = vadd.f32 %v311, %v1036
    %1038 = vdwg.mxu0
    %v1039 = vadd.f32 %v195, %v997
    %v1040 = vxor.u32 %v1039, 2147483648
    %v1041 = vmul.f32 %v1040, 1.442695
    %v1042 = vpow.pop %v1041
    %v1043 = vadd.f32 %v1042, 1.0
    %v1044 = vrcp.pop %v1043
    %v1045 = vmul.f32 %v1043, %v1044
    %v1046 = vsub.f32 1.0, %v1045
    %v1047 = vmul.f32 %v1044, %v1046
    %v1048 = vadd.f32 %v1044, %v1047
    %vm1049 = vweird.f32 %v1043
    %vm1050 = vweird.f32 %v1044
    %vm1051 = vmor %vm1049, %vm1050
    %v1052 = vsel %vm1051, %v1044, %v1048
    %v1053 = vand.u32 2147483647, %v1043
    %vm1054 = vcmp.eq.f32.partialorder %v1053, 8.507059e+37
    %v1055 = vand.u32 %v1043, 2147483648
    %v1056 = vor.u32 1.1754944e-38, %v1055
    %v1057 = vsel %vm1054, %v1056, %v1052
    %v1058 = vmul.f32 1.0, %v1057
    %v1059 = vadd.f32 %v247, %v1017
    %v1060 = vxor.u32 %v1059, 2147483648
    %v1061 = vmul.f32 %v1060, 1.442695
    %v1062 = vpow.pop %v1061
    %v1063 = vadd.f32 %v1062, 1.0
    %v1064 = vrcp.pop %v1063
    %v1065 = vmul.f32 %v1063, %v1064
    %v1066 = vsub.f32 1.0, %v1065
    %v1067 = vmul.f32 %v1064, %v1066
    %v1068 = vadd.f32 %v1064, %v1067
    %vm1069 = vweird.f32 %v1063
    %vm1070 = vweird.f32 %v1064
    %vm1071 = vmor %vm1069, %vm1070
    %v1072 = vsel %vm1071, %v1064, %v1068
    %v1073 = vand.u32 2147483647, %v1063
    %vm1074 = vcmp.eq.f32.partialorder %v1073, 8.507059e+37
    %v1075 = vand.u32 %v1063, 2147483648
    %v1076 = vor.u32 1.1754944e-38, %v1075
    %v1077 = vsel %vm1074, %v1076, %v1072
    %v1078 = vmul.f32 1.0, %v1077
    %v1079 = vmul.f32 %v1058, %v1037
    %v1080 = vadd.f32 %v299, %v1079
    %v1081 = vtanh.pop %v1080
    %v1082 = vsub.f32 1.0, %v1078
    %v1083 = vmul.f32 %v1082, %v1081
    %v1084 = vmul.f32 %v1078, %v975
    %v1085 = vadd.f32 %v1083, %v1084
    %v1087 = vsel %vm315, %v1085, 0
    %1089 = vmatpush.msra.mxu0 0.0
    %1090 = vmatpush.msra.mxu0 0.0
    %1091 = vmatpush.msra.mxu0 0.0
    %1092 = vmatpush.msra.mxu0 0.0
    %1093 = vmatpush.msra.mxu0 0.0
    %1094 = vmatpush.msra.mxu0 0.0
    %1095 = vmatpush.msra.mxu0 0.0
    %1096 = vmatpush.msra.mxu0 0.0
    %1097 = vmatpush.msra.mxu0 0.0
    %1098 = vmatpush.msra.mxu0 0.0
    %1099 = vmatpush.msra.mxu0 0.0
    %1100 = vmatpush.msra.mxu0 0.0
    %1101 = vmatpush.msra.mxu0 %v43
    %1102 = vmatpush.msra.mxu0 %v40
    %1103 = vmatpush.msra.mxu0 %v37
    %1104 = vmatpush.msra.mxu0 %v34
    %1105 = vmatmul.f32.gmra.mxu0 %v1087
    %v1106 = vpop.f32.mrf.mxu0
    %v1107 = vadd.f32 %v309, %v1106
    %1108 = vdwg.mxu0
    %1109 = vmatpush.msra.mxu0 0.0
    %1110 = vmatpush.msra.mxu0 0.0
    %1111 = vmatpush.msra.mxu0 0.0
    %1112 = vmatpush.msra.mxu0 0.0
    %1113 = vmatpush.msra.mxu0 0.0
    %1114 = vmatpush.msra.mxu0 0.0
    %1115 = vmatpush.msra.mxu0 0.0
    %1116 = vmatpush.msra.mxu0 0.0
    %1117 = vmatpush.msra.mxu0 0.0
    %1118 = vmatpush.msra.mxu0 0.0
    %1119 = vmatpush.msra.mxu0 0.0
    %1120 = vmatpush.msra.mxu0 0.0
    %1121 = vmatpush.msra.mxu0 %v44
    %1122 = vmatpush.msra.mxu0 %v41
    %1123 = vmatpush.msra.mxu0 %v38
    %1124 = vmatpush.msra.mxu0 %v35
    %1125 = vmatmul.f32.gmra.mxu0 %v1087
    %v1126 = vpop.f32.mrf.mxu0
    %v1127 = vadd.f32 %v310, %v1126
    %1128 = vdwg.mxu0
    %1129 = vmatpush.msra.mxu0 0.0
    %1130 = vmatpush.msra.mxu0 0.0
    %1131 = vmatpush.msra.mxu0 0.0
    %1132 = vmatpush.msra.mxu0 0.0
    %1133 = vmatpush.msra.mxu0 0.0
    %1134 = vmatpush.msra.mxu0 0.0
    %1135 = vmatpush.msra.mxu0 0.0
    %1136 = vmatpush.msra.mxu0 0.0
    %1137 = vmatpush.msra.mxu0 0.0
    %1138 = vmatpush.msra.mxu0 0.0
    %1139 = vmatpush.msra.mxu0 0.0
    %1140 = vmatpush.msra.mxu0 0.0
    %1141 = vmatpush.msra.mxu0 %v45
    %1142 = vmatpush.msra.mxu0 %v42
    %1143 = vmatpush.msra.mxu0 %v39
    %1144 = vmatpush.msra.mxu0 %v36
    %1145 = vmatmul.f32.gmra.mxu0 %v1087
    %v1146 = vpop.f32.mrf.mxu0
    %v1147 = vadd.f32 %v311, %v1146
    %1148 = vdwg.mxu0
    %v1149 = vadd.f32 %v203, %v1107
    %v1150 = vxor.u32 %v1149, 2147483648
    %v1151 = vmul.f32 %v1150, 1.442695
    %v1152 = vpow.pop %v1151
    %v1153 = vadd.f32 %v1152, 1.0
    %v1154 = vrcp.pop %v1153
    %v1155 = vmul.f32 %v1153, %v1154
    %v1156 = vsub.f32 1.0, %v1155
    %v1157 = vmul.f32 %v1154, %v1156
    %v1158 = vadd.f32 %v1154, %v1157
    %vm1159 = vweird.f32 %v1153
    %vm1160 = vweird.f32 %v1154
    %vm1161 = vmor %vm1159, %vm1160
    %v1162 = vsel %vm1161, %v1154, %v1158
    %v1163 = vand.u32 2147483647, %v1153
    %vm1164 = vcmp.eq.f32.partialorder %v1163, 8.507059e+37
    %v1165 = vand.u32 %v1153, 2147483648
    %v1166 = vor.u32 1.1754944e-38, %v1165
    %v1167 = vsel %vm1164, %v1166, %v1162
    %v1168 = vmul.f32 1.0, %v1167
    %v1169 = vadd.f32 %v255, %v1127
    %v1170 = vxor.u32 %v1169, 2147483648
    %v1171 = vmul.f32 %v1170, 1.442695
    %v1172 = vpow.pop %v1171
    %v1173 = vadd.f32 %v1172, 1.0
    %v1174 = vrcp.pop %v1173
    %v1175 = vmul.f32 %v1173, %v1174
    %v1176 = vsub.f32 1.0, %v1175
    %v1177 = vmul.f32 %v1174, %v1176
    %v1178 = vadd.f32 %v1174, %v1177
    %vm1179 = vweird.f32 %v1173
    %vm1180 = vweird.f32 %v1174
    %vm1181 = vmor %vm1179, %vm1180
    %v1182 = vsel %vm1181, %v1174, %v1178
    %v1183 = vand.u32 2147483647, %v1173
    %vm1184 = vcmp.eq.f32.partialorder %v1183, 8.507059e+37
    %v1185 = vand.u32 %v1173, 2147483648
    %v1186 = vor.u32 1.1754944e-38, %v1185
    %v1187 = vsel %vm1184, %v1186, %v1182
    %v1188 = vmul.f32 1.0, %v1187
    %v1189 = vmul.f32 %v1168, %v1147
    %v1190 = vadd.f32 %v307, %v1189
    %v1191 = vtanh.pop %v1190
    %v1192 = vsub.f32 1.0, %v1188
    %v1193 = vmul.f32 %v1192, %v1191
    %v1194 = vmul.f32 %v1188, %v1085
    %v1195 = vadd.f32 %v1193, %v1194
    %v1196 = vmul.f32 %v1195, %v53
    %v1197 = vadd.f32 %v1196, %v54
    %v1198 = vmax.f32 %v1197, 0.0
    %v1200 = vsel %vm315, %v1198, 0
    %1202 = vmatpush.msra.mxu0 0.0
    %1203 = vmatpush.msra.mxu0 0.0
    %1204 = vmatpush.msra.mxu0 0.0
    %1205 = vmatpush.msra.mxu0 0.0
    %1206 = vmatpush.msra.mxu0 0.0
    %1207 = vmatpush.msra.mxu0 0.0
    %1208 = vmatpush.msra.mxu0 0.0
    %1209 = vmatpush.msra.mxu0 0.0
    %1210 = vmatpush.msra.mxu0 0.0
    %1211 = vmatpush.msra.mxu0 0.0
    %1212 = vmatpush.msra.mxu0 0.0
    %1213 = vmatpush.msra.mxu0 0.0
    %1214 = vmatpush.msra.mxu0 %v49
    %1215 = vmatpush.msra.mxu0 %v48
    %1216 = vmatpush.msra.mxu0 %v47
    %1217 = vmatpush.msra.mxu0 %v46
    %1218 = vmatmul.f32.gmra.mxu0 %v1200
    %v1219 = vpop.f32.mrf.mxu0
    %v1220 = vadd.f32 %v55, %v1219
    %1221 = vdwg.mxu0
    %vm1222 = vcmask 25600
    %1223 = vst.msk [vmem:[#allocation5] sm:$0x3] %vm1222, %v1220
    // Predicated region
    $region18: #{_forward.1} parent=1 // pred_check
      _
    $region19: #{_forward.1} parent=1 // pred_check_branch
      %1225 = sbr.rel (0) target = $region21
    $region20: #{_forward.1} parent=1 // pred_region
      %1227 = vsyncadd [#allocation4], 0
      %s1229 = sshll.u32 [#allocation5], 4
      %s1230 = int_to_ptr.vmem [resolvable:$true] %s1229
      %s1231 = sshll.u32 %s3, 4
      %s1232 = int_to_ptr.hbm [resolvable:$true] %s1231
      %1234 = dma.vmem_to_hbm [thread:$0]  %s1230, 32, %s1232, [#allocation4]
    $region21: #{_forward.1} parent=1 // pred_fallthru
      _
    // Predicated region
    $region22: #{_forward.1} parent=1 // pred_check
      _
    $region23: #{_forward.1} parent=1 // pred_check_branch
      %1236 = sbr.rel (0) target = $region25
    $region24: #{_forward.1} parent=1 // pred_region
      %1238 = dma.done [#allocation4], 32
    $region25: #{_forward.1} parent=1 // pred_fallthru
      _
    %1239 = vsyncpa [#allocation3], 1
    %1240 = vsyncpa [#allocation4], 1

</llo_original>
